<compile_context>
chip_gen: v7x
topology: tpu7x:2x2x1
jax: 0.10.0
libtpu: 0.0.40
codegen_flags: <defaults>
</compile_context>

<pallas_src>
import functools

import jax
import jax.numpy as jnp
from jax import lax
from jax.experimental import pallas as pl
from jax.experimental.pallas import tpu as pltpu


def _round_up(x, m):
    return (x + m - 1) // m * m


def _lane_window(v, off, width):
    """Return v[:, off:off+width] via a lane roll (XLU) + offset-0 slice.

    Composing pltpu.roll with an aligned (offset-0) slice avoids relying on
    unaligned lane-slice lowering; `width` is a multiple of 128 or 1.
    """
    n = v.shape[-1]
    s = (n - off) % n
    if s:
        v = pltpu.roll(v, shift=s, axis=1)   # output[j] = input[(j + off) mod n]
    return v[:, :width]


# ---------------------------------------------------------------------------
# Pallas kernel: conv as C*K*K lane-shifted VPU FMAs, Po on sublanes
# ---------------------------------------------------------------------------
def _conv_tap_kernel(x_ref, w_ref, o_ref, *, C, K, Hp, Wp, CKK):
    # x_ref : [1, 1, Lpad]       zero-padded image, flattened (c, h, w) on LANES
    # w_ref : [Po_pad, TW]       col t=(c*K+kh)*K+kw -> tap weight, col CKK -> bias
    # o_ref : [1, Po_pad, Mx_pad]  lane m = ho*Wp + wo'   (wo' in [0, Wp))
    Po_pad, Mx_pad = o_ref.shape[1], o_ref.shape[2]

    xrow = x_ref[0]            # [1, Lpad]    lane-major input row (~4 vregs)
    wtab = w_ref[...]          # [Po_pad, TW] resident weight+bias table (2 vregs)

    acc = jnp.zeros((Po_pad, Mx_pad), dtype=jnp.float32)   # 6 vregs, Po on sublanes
    for c in range(C):
        for kh in range(K):
            for kw in range(K):
                t = (c * K + kh) * K + kw
                off = c * Hp * Wp + kh * Wp + kw
                # lane m now holds x_flat[m + off]          (XLU roll, off-VPU)
                x_t = _lane_window(xrow, off, Mx_pad)       # [1, Mx_pad]
                # tap-t weight column on sublanes           (XLU roll, off-VPU)
                w_t = _lane_window(wtab, t, 1)              # [Po_pad, 1]
                acc = acc + w_t * x_t                       # VPU FMA, 6 vregs
    b_col = _lane_window(wtab, CKK, 1)                      # [Po_pad, 1] bias column
    o_ref[0, :, :] = jnp.maximum(acc + b_col, 0.0).astype(o_ref.dtype)


# ---------------------------------------------------------------------------
# Wrapper reproducing Conv.forward semantics: relu(conv2d(x)).unsqueeze(1)
# ---------------------------------------------------------------------------
def prepare_conv_params(weight, bias):
    """Pack conv weight + bias into one resident [Po_pad, TW] f32 table.

    Rows = output channels (sublanes); column t=(c*K+kh)*K+kw holds the tap
    weight, column C*K*K holds the bias.  Call ONCE per model (hoisted out of
    the per-image jitted path, per review item 11).
    """
    Po, C, K, _ = weight.shape
    CKK = C * K * K
    TW = _round_up(CKK + 1, 128)
    Po_pad = _round_up(Po, 8)
    tab = jnp.concatenate(
        [weight.astype(jnp.float32).reshape(Po, CKK),
         bias.astype(jnp.float32)[:, None]], axis=1)
    return jnp.pad(tab, ((0, Po_pad - Po), (0, TW - (CKK + 1))))


def conv_forward(x, w_tab, *, C, Po, K, stride, padding):
    """
    x      : [B, C, Hi, Wi]   (NCHW, like PyTorch)
    w_tab  : packed table from prepare_conv_params(weight, bias)
    return : [B, 1, Po, Ho, Wo]
    """
    if stride != 1:
        # TODO(synk): stride>1 (PrimaryCaps-style) not implemented in this kernel.
        raise NotImplementedError("Pallas Conv kernel currently supports stride=1 only")

    B, Cx, Hi, Wi = x.shape
    assert Cx == C
    Hp, Wp = Hi + 2 * padding, Wi + 2 * padding
    Ho, Wo = Hp - K + 1, Wp - K + 1
    CKK = C * K * K
    Po_pad, TW = w_tab.shape

    Mx = Ho * Wp                                   # expanded lane space m = ho*Wp + wo'
    Mx_pad = _round_up(Mx, 128)
    max_off = (C - 1) * Hp * Wp + (K - 1) * Wp + (K - 1)
    Lpad = _round_up(max(C * Hp * Wp, max_off + Mx_pad), 128)   # no roll wrap-around

    # Dense lane-major input row (no im2col, no single-lane column layout).
    x_flat = jnp.pad(x.astype(jnp.float32),
                     ((0, 0), (0, 0), (padding, padding), (padding, padding)))
    x_flat = x_flat.reshape(B, C * Hp * Wp)
    x_flat = jnp.pad(x_flat, ((0, 0), (0, Lpad - C * Hp * Wp)))[:, None, :]  # [B,1,Lpad]

    kernel = functools.partial(_conv_tap_kernel, C=C, K=K, Hp=Hp, Wp=Wp, CKK=CKK)

    out = pl.pallas_call(
        kernel,
        out_shape=jax.ShapeDtypeStruct((B, Po_pad, Mx_pad), jnp.float32),
        grid_spec=pltpu.PrefetchScalarGridSpec(
            num_scalar_prefetch=0,
            grid=(B,),
            in_specs=[
                pl.BlockSpec((1, 1, Lpad), lambda b: (b, 0, 0)),
                pl.BlockSpec((Po_pad, TW), lambda b: (0, 0)),   # resident weights+bias
            ],
            out_specs=pl.BlockSpec((1, Po_pad, Mx_pad), lambda b: (b, 0, 0)),
        ),
        compiler_params=pltpu.CompilerParams(
            dimension_semantics=("parallel",),
        ),
    )(x_flat, w_tab)                               # [B, Po_pad, Mx_pad]

    # Already (Po, ho, wo)-major — just drop padding; no transpose pass.
    out = out[:, :Po, :Mx].reshape(B, Po, Ho, Wp)[:, :, :, :Wo]
    return out[:, None]                            # [B, 1, Po, Ho, Wo]


# ---------------------------------------------------------------------------
# Main
# ---------------------------------------------------------------------------
if __name__ == "__main__":
    # CapsNet2D.Conv1 config: Conv(in_ch=1, Po=16, K=5, stride=1, padding=2)
    in_ch, Po, K, stride, padding = 1, 16, 5, 1, 2
    B, Hi, Wi = 2, 16, 16

    key = jax.random.PRNGKey(0)
    kx, kw, kb = jax.random.split(key, 3)

    x = jax.random.normal(kx, (B, in_ch, Hi, Wi), dtype=jnp.float32)
    fan_in = in_ch * K * K
    bound = 1.0 / (fan_in ** 0.5)
    weight = jax.random.uniform(kw, (Po, in_ch, K, K), dtype=jnp.float32,
                                minval=-bound, maxval=bound)
    bias = jax.random.uniform(kb, (Po,), dtype=jnp.float32,
                              minval=-bound, maxval=bound)

    # Once-per-model parameter packing (hoisted out of the per-image jit).
    w_tab = jax.block_until_ready(prepare_conv_params(weight, bias))

    fwd = jax.jit(functools.partial(conv_forward, C=in_ch, Po=Po, K=K,
                                    stride=stride, padding=padding))
    out = jax.block_until_ready(fwd(x, w_tab))

    # Reference: XLA conv == nn.Conv2d + ReLU + unsqueeze(1)   (all f32, tight tol)
    ref = lax.conv_general_dilated(
        x, weight, window_strides=(stride, stride),
        padding=[(padding, padding), (padding, padding)],
        dimension_numbers=("NCHW", "OIHW", "NCHW"),
    ) + bias[None, :, None, None]
    ref = jnp.maximum(ref, 0.0)[:, None]

    Ho = (Hi + 2 * padding - K) // stride + 1
    Wo = (Wi + 2 * padding - K) // stride + 1
    assert out.shape == (B, 1, Po, Ho, Wo), out.shape
    assert jnp.allclose(out, ref, atol=1e-4, rtol=1e-4), "mismatch vs XLA reference"

    print("KERNEL_OK")
</pallas_src>

<mosaic_0001>
module attributes {stable_mosaic.version = 11 : i64} {
  func.func @_conv_tap_kernel(%arg0: i32, %arg1: memref<1x1x512xf32, #tpu.memory_space<vmem>>, %arg2: memref<16x128xf32, #tpu.memory_space<vmem>>, %arg3: memref<1x16x384xf32, #tpu.memory_space<vmem>>) attributes {dimension_semantics = [#tpu.dimension_semantics<parallel>], iteration_bounds = array<i64: 2>, scalar_prefetch = 0 : i64, scratch_operands = 0 : i64, tpu.core_type = #tpu.core_type<tc>, window_params = [{transform_indices = @transform_0, window_bounds = array<i64: 1, 1, 512>}, {pipeline_mode = #tpu.pipeline_mode<synchronous>, transform_indices = @transform_1, window_bounds = array<i64: 16, 128>}, {transform_indices = @transform_2, window_bounds = array<i64: 1, 16, 384>}]} {
    %c0 = arith.constant 0 : index
    %c0_0 = arith.constant 0 : index
    %c0_1 = arith.constant 0 : index
    %0 = vector.load %arg1[%c0, %c0_0, %c0_1] : memref<1x1x512xf32, #tpu.memory_space<vmem>>, vector<1x1x512xf32>
    %1 = vector.shape_cast %0 : vector<1x1x512xf32> to vector<1x512xf32>
    %c0_2 = arith.constant 0 : index
    %c0_3 = arith.constant 0 : index
    %2 = vector.load %arg2[%c0_2, %c0_3] : memref<16x128xf32, #tpu.memory_space<vmem>>, vector<16x128xf32>
    %cst = arith.constant 0.000000e+00 : f32
    %3 = vector.broadcast %cst : f32 to vector<16x384xf32>
    %4 = vector.extract_strided_slice %1 {offsets = [0, 0], sizes = [1, 384], strides = [1, 1]} : vector<1x512xf32> to vector<1x384xf32>
    %5 = vector.extract_strided_slice %2 {offsets = [0, 0], sizes = [16, 1], strides = [1, 1]} : vector<16x128xf32> to vector<16x1xf32>
    %6 = vector.broadcast %5 : vector<16x1xf32> to vector<16x384xf32>
    %7 = vector.broadcast %4 : vector<1x384xf32> to vector<16x384xf32>
    %8 = arith.mulf %6, %7 : vector<16x384xf32>
    %9 = arith.addf %3, %8 : vector<16x384xf32>
    %c511_i32 = arith.constant 511 : i32
    %10 = tpu.dynamic_rotate %1 by %c511_i32 dim 1 : vector<1x512xf32>, i32 -> vector<1x512xf32>
    %11 = vector.extract_strided_slice %10 {offsets = [0, 0], sizes = [1, 384], strides = [1, 1]} : vector<1x512xf32> to vector<1x384xf32>
    %c127_i32 = arith.constant 127 : i32
    %12 = tpu.dynamic_rotate %2 by %c127_i32 dim 1 : vector<16x128xf32>, i32 -> vector<16x128xf32>
    %13 = vector.extract_strided_slice %12 {offsets = [0, 0], sizes = [16, 1], strides = [1, 1]} : vector<16x128xf32> to vector<16x1xf32>
    %14 = vector.broadcast %13 : vector<16x1xf32> to vector<16x384xf32>
    %15 = vector.broadcast %11 : vector<1x384xf32> to vector<16x384xf32>
    %16 = arith.mulf %14, %15 : vector<16x384xf32>
    %17 = arith.addf %9, %16 : vector<16x384xf32>
    %c510_i32 = arith.constant 510 : i32
    %18 = tpu.dynamic_rotate %1 by %c510_i32 dim 1 : vector<1x512xf32>, i32 -> vector<1x512xf32>
    %19 = vector.extract_strided_slice %18 {offsets = [0, 0], sizes = [1, 384], strides = [1, 1]} : vector<1x512xf32> to vector<1x384xf32>
    %c126_i32 = arith.constant 126 : i32
    %20 = tpu.dynamic_rotate %2 by %c126_i32 dim 1 : vector<16x128xf32>, i32 -> vector<16x128xf32>
    %21 = vector.extract_strided_slice %20 {offsets = [0, 0], sizes = [16, 1], strides = [1, 1]} : vector<16x128xf32> to vector<16x1xf32>
    %22 = vector.broadcast %21 : vector<16x1xf32> to vector<16x384xf32>
    %23 = vector.broadcast %19 : vector<1x384xf32> to vector<16x384xf32>
    %24 = arith.mulf %22, %23 : vector<16x384xf32>
    %25 = arith.addf %17, %24 : vector<16x384xf32>
    %c509_i32 = arith.constant 509 : i32
    %26 = tpu.dynamic_rotate %1 by %c509_i32 dim 1 : vector<1x512xf32>, i32 -> vector<1x512xf32>
    %27 = vector.extract_strided_slice %26 {offsets = [0, 0], sizes = [1, 384], strides = [1, 1]} : vector<1x512xf32> to vector<1x384xf32>
    %c125_i32 = arith.constant 125 : i32
    %28 = tpu.dynamic_rotate %2 by %c125_i32 dim 1 : vector<16x128xf32>, i32 -> vector<16x128xf32>
    %29 = vector.extract_strided_slice %28 {offsets = [0, 0], sizes = [16, 1], strides = [1, 1]} : vector<16x128xf32> to vector<16x1xf32>
    %30 = vector.broadcast %29 : vector<16x1xf32> to vector<16x384xf32>
    %31 = vector.broadcast %27 : vector<1x384xf32> to vector<16x384xf32>
    %32 = arith.mulf %30, %31 : vector<16x384xf32>
    %33 = arith.addf %25, %32 : vector<16x384xf32>
    %c508_i32 = arith.constant 508 : i32
    %34 = tpu.dynamic_rotate %1 by %c508_i32 dim 1 : vector<1x512xf32>, i32 -> vector<1x512xf32>
    %35 = vector.extract_strided_slice %34 {offsets = [0, 0], sizes = [1, 384], strides = [1, 1]} : vector<1x512xf32> to vector<1x384xf32>
    %c124_i32 = arith.constant 124 : i32
    %36 = tpu.dynamic_rotate %2 by %c124_i32 dim 1 : vector<16x128xf32>, i32 -> vector<16x128xf32>
    %37 = vector.extract_strided_slice %36 {offsets = [0, 0], sizes = [16, 1], strides = [1, 1]} : vector<16x128xf32> to vector<16x1xf32>
    %38 = vector.broadcast %37 : vector<16x1xf32> to vector<16x384xf32>
    %39 = vector.broadcast %35 : vector<1x384xf32> to vector<16x384xf32>
    %40 = arith.mulf %38, %39 : vector<16x384xf32>
    %41 = arith.addf %33, %40 : vector<16x384xf32>
    %c492_i32 = arith.constant 492 : i32
    %42 = tpu.dynamic_rotate %1 by %c492_i32 dim 1 : vector<1x512xf32>, i32 -> vector<1x512xf32>
    %43 = vector.extract_strided_slice %42 {offsets = [0, 0], sizes = [1, 384], strides = [1, 1]} : vector<1x512xf32> to vector<1x384xf32>
    %c123_i32 = arith.constant 123 : i32
    %44 = tpu.dynamic_rotate %2 by %c123_i32 dim 1 : vector<16x128xf32>, i32 -> vector<16x128xf32>
    %45 = vector.extract_strided_slice %44 {offsets = [0, 0], sizes = [16, 1], strides = [1, 1]} : vector<16x128xf32> to vector<16x1xf32>
    %46 = vector.broadcast %45 : vector<16x1xf32> to vector<16x384xf32>
    %47 = vector.broadcast %43 : vector<1x384xf32> to vector<16x384xf32>
    %48 = arith.mulf %46, %47 : vector<16x384xf32>
    %49 = arith.addf %41, %48 : vector<16x384xf32>
    %c491_i32 = arith.constant 491 : i32
    %50 = tpu.dynamic_rotate %1 by %c491_i32 dim 1 : vector<1x512xf32>, i32 -> vector<1x512xf32>
    %51 = vector.extract_strided_slice %50 {offsets = [0, 0], sizes = [1, 384], strides = [1, 1]} : vector<1x512xf32> to vector<1x384xf32>
    %c122_i32 = arith.constant 122 : i32
    %52 = tpu.dynamic_rotate %2 by %c122_i32 dim 1 : vector<16x128xf32>, i32 -> vector<16x128xf32>
    %53 = vector.extract_strided_slice %52 {offsets = [0, 0], sizes = [16, 1], strides = [1, 1]} : vector<16x128xf32> to vector<16x1xf32>
    %54 = vector.broadcast %53 : vector<16x1xf32> to vector<16x384xf32>
    %55 = vector.broadcast %51 : vector<1x384xf32> to vector<16x384xf32>
    %56 = arith.mulf %54, %55 : vector<16x384xf32>
    %57 = arith.addf %49, %56 : vector<16x384xf32>
    %c490_i32 = arith.constant 490 : i32
    %58 = tpu.dynamic_rotate %1 by %c490_i32 dim 1 : vector<1x512xf32>, i32 -> vector<1x512xf32>
    %59 = vector.extract_strided_slice %58 {offsets = [0, 0], sizes = [1, 384], strides = [1, 1]} : vector<1x512xf32> to vector<1x384xf32>
    %c121_i32 = arith.constant 121 : i32
    %60 = tpu.dynamic_rotate %2 by %c121_i32 dim 1 : vector<16x128xf32>, i32 -> vector<16x128xf32>
    %61 = vector.extract_strided_slice %60 {offsets = [0, 0], sizes = [16, 1], strides = [1, 1]} : vector<16x128xf32> to vector<16x1xf32>
    %62 = vector.broadcast %61 : vector<16x1xf32> to vector<16x384xf32>
    %63 = vector.broadcast %59 : vector<1x384xf32> to vector<16x384xf32>
    %64 = arith.mulf %62, %63 : vector<16x384xf32>
    %65 = arith.addf %57, %64 : vector<16x384xf32>
    %c489_i32 = arith.constant 489 : i32
    %66 = tpu.dynamic_rotate %1 by %c489_i32 dim 1 : vector<1x512xf32>, i32 -> vector<1x512xf32>
    %67 = vector.extract_strided_slice %66 {offsets = [0, 0], sizes = [1, 384], strides = [1, 1]} : vector<1x512xf32> to vector<1x384xf32>
    %c120_i32 = arith.constant 120 : i32
    %68 = tpu.dynamic_rotate %2 by %c120_i32 dim 1 : vector<16x128xf32>, i32 -> vector<16x128xf32>
    %69 = vector.extract_strided_slice %68 {offsets = [0, 0], sizes = [16, 1], strides = [1, 1]} : vector<16x128xf32> to vector<16x1xf32>
    %70 = vector.broadcast %69 : vector<16x1xf32> to vector<16x384xf32>
    %71 = vector.broadcast %67 : vector<1x384xf32> to vector<16x384xf32>
    %72 = arith.mulf %70, %71 : vector<16x384xf32>
    %73 = arith.addf %65, %72 : vector<16x384xf32>
    %c488_i32 = arith.constant 488 : i32
    %74 = tpu.dynamic_rotate %1 by %c488_i32 dim 1 : vector<1x512xf32>, i32 -> vector<1x512xf32>
    %75 = vector.extract_strided_slice %74 {offsets = [0, 0], sizes = [1, 384], strides = [1, 1]} : vector<1x512xf32> to vector<1x384xf32>
    %c119_i32 = arith.constant 119 : i32
    %76 = tpu.dynamic_rotate %2 by %c119_i32 dim 1 : vector<16x128xf32>, i32 -> vector<16x128xf32>
    %77 = vector.extract_strided_slice %76 {offsets = [0, 0], sizes = [16, 1], strides = [1, 1]} : vector<16x128xf32> to vector<16x1xf32>
    %78 = vector.broadcast %77 : vector<16x1xf32> to vector<16x384xf32>
    %79 = vector.broadcast %75 : vector<1x384xf32> to vector<16x384xf32>
    %80 = arith.mulf %78, %79 : vector<16x384xf32>
    %81 = arith.addf %73, %80 : vector<16x384xf32>
    %c472_i32 = arith.constant 472 : i32
    %82 = tpu.dynamic_rotate %1 by %c472_i32 dim 1 : vector<1x512xf32>, i32 -> vector<1x512xf32>
    %83 = vector.extract_strided_slice %82 {offsets = [0, 0], sizes = [1, 384], strides = [1, 1]} : vector<1x512xf32> to vector<1x384xf32>
    %c118_i32 = arith.constant 118 : i32
    %84 = tpu.dynamic_rotate %2 by %c118_i32 dim 1 : vector<16x128xf32>, i32 -> vector<16x128xf32>
    %85 = vector.extract_strided_slice %84 {offsets = [0, 0], sizes = [16, 1], strides = [1, 1]} : vector<16x128xf32> to vector<16x1xf32>
    %86 = vector.broadcast %85 : vector<16x1xf32> to vector<16x384xf32>
    %87 = vector.broadcast %83 : vector<1x384xf32> to vector<16x384xf32>
    %88 = arith.mulf %86, %87 : vector<16x384xf32>
    %89 = arith.addf %81, %88 : vector<16x384xf32>
    %c471_i32 = arith.constant 471 : i32
    %90 = tpu.dynamic_rotate %1 by %c471_i32 dim 1 : vector<1x512xf32>, i32 -> vector<1x512xf32>
    %91 = vector.extract_strided_slice %90 {offsets = [0, 0], sizes = [1, 384], strides = [1, 1]} : vector<1x512xf32> to vector<1x384xf32>
    %c117_i32 = arith.constant 117 : i32
    %92 = tpu.dynamic_rotate %2 by %c117_i32 dim 1 : vector<16x128xf32>, i32 -> vector<16x128xf32>
    %93 = vector.extract_strided_slice %92 {offsets = [0, 0], sizes = [16, 1], strides = [1, 1]} : vector<16x128xf32> to vector<16x1xf32>
    %94 = vector.broadcast %93 : vector<16x1xf32> to vector<16x384xf32>
    %95 = vector.broadcast %91 : vector<1x384xf32> to vector<16x384xf32>
    %96 = arith.mulf %94, %95 : vector<16x384xf32>
    %97 = arith.addf %89, %96 : vector<16x384xf32>
    %c470_i32 = arith.constant 470 : i32
    %98 = tpu.dynamic_rotate %1 by %c470_i32 dim 1 : vector<1x512xf32>, i32 -> vector<1x512xf32>
    %99 = vector.extract_strided_slice %98 {offsets = [0, 0], sizes = [1, 384], strides = [1, 1]} : vector<1x512xf32> to vector<1x384xf32>
    %c116_i32 = arith.constant 116 : i32
    %100 = tpu.dynamic_rotate %2 by %c116_i32 dim 1 : vector<16x128xf32>, i32 -> vector<16x128xf32>
    %101 = vector.extract_strided_slice %100 {offsets = [0, 0], sizes = [16, 1], strides = [1, 1]} : vector<16x128xf32> to vector<16x1xf32>
    %102 = vector.broadcast %101 : vector<16x1xf32> to vector<16x384xf32>
    %103 = vector.broadcast %99 : vector<1x384xf32> to vector<16x384xf32>
    %104 = arith.mulf %102, %103 : vector<16x384xf32>
    %105 = arith.addf %97, %104 : vector<16x384xf32>
    %c469_i32 = arith.constant 469 : i32
    %106 = tpu.dynamic_rotate %1 by %c469_i32 dim 1 : vector<1x512xf32>, i32 -> vector<1x512xf32>
    %107 = vector.extract_strided_slice %106 {offsets = [0, 0], sizes = [1, 384], strides = [1, 1]} : vector<1x512xf32> to vector<1x384xf32>
    %c115_i32 = arith.constant 115 : i32
    %108 = tpu.dynamic_rotate %2 by %c115_i32 dim 1 : vector<16x128xf32>, i32 -> vector<16x128xf32>
    %109 = vector.extract_strided_slice %108 {offsets = [0, 0], sizes = [16, 1], strides = [1, 1]} : vector<16x128xf32> to vector<16x1xf32>
    %110 = vector.broadcast %109 : vector<16x1xf32> to vector<16x384xf32>
    %111 = vector.broadcast %107 : vector<1x384xf32> to vector<16x384xf32>
    %112 = arith.mulf %110, %111 : vector<16x384xf32>
    %113 = arith.addf %105, %112 : vector<16x384xf32>
    %c468_i32 = arith.constant 468 : i32
    %114 = tpu.dynamic_rotate %1 by %c468_i32 dim 1 : vector<1x512xf32>, i32 -> vector<1x512xf32>
    %115 = vector.extract_strided_slice %114 {offsets = [0, 0], sizes = [1, 384], strides = [1, 1]} : vector<1x512xf32> to vector<1x384xf32>
    %c114_i32 = arith.constant 114 : i32
    %116 = tpu.dynamic_rotate %2 by %c114_i32 dim 1 : vector<16x128xf32>, i32 -> vector<16x128xf32>
    %117 = vector.extract_strided_slice %116 {offsets = [0, 0], sizes = [16, 1], strides = [1, 1]} : vector<16x128xf32> to vector<16x1xf32>
    %118 = vector.broadcast %117 : vector<16x1xf32> to vector<16x384xf32>
    %119 = vector.broadcast %115 : vector<1x384xf32> to vector<16x384xf32>
    %120 = arith.mulf %118, %119 : vector<16x384xf32>
    %121 = arith.addf %113, %120 : vector<16x384xf32>
    %c452_i32 = arith.constant 452 : i32
    %122 = tpu.dynamic_rotate %1 by %c452_i32 dim 1 : vector<1x512xf32>, i32 -> vector<1x512xf32>
    %123 = vector.extract_strided_slice %122 {offsets = [0, 0], sizes = [1, 384], strides = [1, 1]} : vector<1x512xf32> to vector<1x384xf32>
    %c113_i32 = arith.constant 113 : i32
    %124 = tpu.dynamic_rotate %2 by %c113_i32 dim 1 : vector<16x128xf32>, i32 -> vector<16x128xf32>
    %125 = vector.extract_strided_slice %124 {offsets = [0, 0], sizes = [16, 1], strides = [1, 1]} : vector<16x128xf32> to vector<16x1xf32>
    %126 = vector.broadcast %125 : vector<16x1xf32> to vector<16x384xf32>
    %127 = vector.broadcast %123 : vector<1x384xf32> to vector<16x384xf32>
    %128 = arith.mulf %126, %127 : vector<16x384xf32>
    %129 = arith.addf %121, %128 : vector<16x384xf32>
    %c451_i32 = arith.constant 451 : i32
    %130 = tpu.dynamic_rotate %1 by %c451_i32 dim 1 : vector<1x512xf32>, i32 -> vector<1x512xf32>
    %131 = vector.extract_strided_slice %130 {offsets = [0, 0], sizes = [1, 384], strides = [1, 1]} : vector<1x512xf32> to vector<1x384xf32>
    %c112_i32 = arith.constant 112 : i32
    %132 = tpu.dynamic_rotate %2 by %c112_i32 dim 1 : vector<16x128xf32>, i32 -> vector<16x128xf32>
    %133 = vector.extract_strided_slice %132 {offsets = [0, 0], sizes = [16, 1], strides = [1, 1]} : vector<16x128xf32> to vector<16x1xf32>
    %134 = vector.broadcast %133 : vector<16x1xf32> to vector<16x384xf32>
    %135 = vector.broadcast %131 : vector<1x384xf32> to vector<16x384xf32>
    %136 = arith.mulf %134, %135 : vector<16x384xf32>
    %137 = arith.addf %129, %136 : vector<16x384xf32>
    %c450_i32 = arith.constant 450 : i32
    %138 = tpu.dynamic_rotate %1 by %c450_i32 dim 1 : vector<1x512xf32>, i32 -> vector<1x512xf32>
    %139 = vector.extract_strided_slice %138 {offsets = [0, 0], sizes = [1, 384], strides = [1, 1]} : vector<1x512xf32> to vector<1x384xf32>
    %c111_i32 = arith.constant 111 : i32
    %140 = tpu.dynamic_rotate %2 by %c111_i32 dim 1 : vector<16x128xf32>, i32 -> vector<16x128xf32>
    %141 = vector.extract_strided_slice %140 {offsets = [0, 0], sizes = [16, 1], strides = [1, 1]} : vector<16x128xf32> to vector<16x1xf32>
    %142 = vector.broadcast %141 : vector<16x1xf32> to vector<16x384xf32>
    %143 = vector.broadcast %139 : vector<1x384xf32> to vector<16x384xf32>
    %144 = arith.mulf %142, %143 : vector<16x384xf32>
    %145 = arith.addf %137, %144 : vector<16x384xf32>
    %c449_i32 = arith.constant 449 : i32
    %146 = tpu.dynamic_rotate %1 by %c449_i32 dim 1 : vector<1x512xf32>, i32 -> vector<1x512xf32>
    %147 = vector.extract_strided_slice %146 {offsets = [0, 0], sizes = [1, 384], strides = [1, 1]} : vector<1x512xf32> to vector<1x384xf32>
    %c110_i32 = arith.constant 110 : i32
    %148 = tpu.dynamic_rotate %2 by %c110_i32 dim 1 : vector<16x128xf32>, i32 -> vector<16x128xf32>
    %149 = vector.extract_strided_slice %148 {offsets = [0, 0], sizes = [16, 1], strides = [1, 1]} : vector<16x128xf32> to vector<16x1xf32>
    %150 = vector.broadcast %149 : vector<16x1xf32> to vector<16x384xf32>
    %151 = vector.broadcast %147 : vector<1x384xf32> to vector<16x384xf32>
    %152 = arith.mulf %150, %151 : vector<16x384xf32>
    %153 = arith.addf %145, %152 : vector<16x384xf32>
    %c448_i32 = arith.constant 448 : i32
    %154 = tpu.dynamic_rotate %1 by %c448_i32 dim 1 : vector<1x512xf32>, i32 -> vector<1x512xf32>
    %155 = vector.extract_strided_slice %154 {offsets = [0, 0], sizes = [1, 384], strides = [1, 1]} : vector<1x512xf32> to vector<1x384xf32>
    %c109_i32 = arith.constant 109 : i32
    %156 = tpu.dynamic_rotate %2 by %c109_i32 dim 1 : vector<16x128xf32>, i32 -> vector<16x128xf32>
    %157 = vector.extract_strided_slice %156 {offsets = [0, 0], sizes = [16, 1], strides = [1, 1]} : vector<16x128xf32> to vector<16x1xf32>
    %158 = vector.broadcast %157 : vector<16x1xf32> to vector<16x384xf32>
    %159 = vector.broadcast %155 : vector<1x384xf32> to vector<16x384xf32>
    %160 = arith.mulf %158, %159 : vector<16x384xf32>
    %161 = arith.addf %153, %160 : vector<16x384xf32>
    %c432_i32 = arith.constant 432 : i32
    %162 = tpu.dynamic_rotate %1 by %c432_i32 dim 1 : vector<1x512xf32>, i32 -> vector<1x512xf32>
    %163 = vector.extract_strided_slice %162 {offsets = [0, 0], sizes = [1, 384], strides = [1, 1]} : vector<1x512xf32> to vector<1x384xf32>
    %c108_i32 = arith.constant 108 : i32
    %164 = tpu.dynamic_rotate %2 by %c108_i32 dim 1 : vector<16x128xf32>, i32 -> vector<16x128xf32>
    %165 = vector.extract_strided_slice %164 {offsets = [0, 0], sizes = [16, 1], strides = [1, 1]} : vector<16x128xf32> to vector<16x1xf32>
    %166 = vector.broadcast %165 : vector<16x1xf32> to vector<16x384xf32>
    %167 = vector.broadcast %163 : vector<1x384xf32> to vector<16x384xf32>
    %168 = arith.mulf %166, %167 : vector<16x384xf32>
    %169 = arith.addf %161, %168 : vector<16x384xf32>
    %c431_i32 = arith.constant 431 : i32
    %170 = tpu.dynamic_rotate %1 by %c431_i32 dim 1 : vector<1x512xf32>, i32 -> vector<1x512xf32>
    %171 = vector.extract_strided_slice %170 {offsets = [0, 0], sizes = [1, 384], strides = [1, 1]} : vector<1x512xf32> to vector<1x384xf32>
    %c107_i32 = arith.constant 107 : i32
    %172 = tpu.dynamic_rotate %2 by %c107_i32 dim 1 : vector<16x128xf32>, i32 -> vector<16x128xf32>
    %173 = vector.extract_strided_slice %172 {offsets = [0, 0], sizes = [16, 1], strides = [1, 1]} : vector<16x128xf32> to vector<16x1xf32>
    %174 = vector.broadcast %173 : vector<16x1xf32> to vector<16x384xf32>
    %175 = vector.broadcast %171 : vector<1x384xf32> to vector<16x384xf32>
    %176 = arith.mulf %174, %175 : vector<16x384xf32>
    %177 = arith.addf %169, %176 : vector<16x384xf32>
    %c430_i32 = arith.constant 430 : i32
    %178 = tpu.dynamic_rotate %1 by %c430_i32 dim 1 : vector<1x512xf32>, i32 -> vector<1x512xf32>
    %179 = vector.extract_strided_slice %178 {offsets = [0, 0], sizes = [1, 384], strides = [1, 1]} : vector<1x512xf32> to vector<1x384xf32>
    %c106_i32 = arith.constant 106 : i32
    %180 = tpu.dynamic_rotate %2 by %c106_i32 dim 1 : vector<16x128xf32>, i32 -> vector<16x128xf32>
    %181 = vector.extract_strided_slice %180 {offsets = [0, 0], sizes = [16, 1], strides = [1, 1]} : vector<16x128xf32> to vector<16x1xf32>
    %182 = vector.broadcast %181 : vector<16x1xf32> to vector<16x384xf32>
    %183 = vector.broadcast %179 : vector<1x384xf32> to vector<16x384xf32>
    %184 = arith.mulf %182, %183 : vector<16x384xf32>
    %185 = arith.addf %177, %184 : vector<16x384xf32>
    %c429_i32 = arith.constant 429 : i32
    %186 = tpu.dynamic_rotate %1 by %c429_i32 dim 1 : vector<1x512xf32>, i32 -> vector<1x512xf32>
    %187 = vector.extract_strided_slice %186 {offsets = [0, 0], sizes = [1, 384], strides = [1, 1]} : vector<1x512xf32> to vector<1x384xf32>
    %c105_i32 = arith.constant 105 : i32
    %188 = tpu.dynamic_rotate %2 by %c105_i32 dim 1 : vector<16x128xf32>, i32 -> vector<16x128xf32>
    %189 = vector.extract_strided_slice %188 {offsets = [0, 0], sizes = [16, 1], strides = [1, 1]} : vector<16x128xf32> to vector<16x1xf32>
    %190 = vector.broadcast %189 : vector<16x1xf32> to vector<16x384xf32>
    %191 = vector.broadcast %187 : vector<1x384xf32> to vector<16x384xf32>
    %192 = arith.mulf %190, %191 : vector<16x384xf32>
    %193 = arith.addf %185, %192 : vector<16x384xf32>
    %c428_i32 = arith.constant 428 : i32
    %194 = tpu.dynamic_rotate %1 by %c428_i32 dim 1 : vector<1x512xf32>, i32 -> vector<1x512xf32>
    %195 = vector.extract_strided_slice %194 {offsets = [0, 0], sizes = [1, 384], strides = [1, 1]} : vector<1x512xf32> to vector<1x384xf32>
    %c104_i32 = arith.constant 104 : i32
    %196 = tpu.dynamic_rotate %2 by %c104_i32 dim 1 : vector<16x128xf32>, i32 -> vector<16x128xf32>
    %197 = vector.extract_strided_slice %196 {offsets = [0, 0], sizes = [16, 1], strides = [1, 1]} : vector<16x128xf32> to vector<16x1xf32>
    %198 = vector.broadcast %197 : vector<16x1xf32> to vector<16x384xf32>
    %199 = vector.broadcast %195 : vector<1x384xf32> to vector<16x384xf32>
    %200 = arith.mulf %198, %199 : vector<16x384xf32>
    %201 = arith.addf %193, %200 : vector<16x384xf32>
    %c103_i32 = arith.constant 103 : i32
    %202 = tpu.dynamic_rotate %2 by %c103_i32 dim 1 : vector<16x128xf32>, i32 -> vector<16x128xf32>
    %203 = vector.extract_strided_slice %202 {offsets = [0, 0], sizes = [16, 1], strides = [1, 1]} : vector<16x128xf32> to vector<16x1xf32>
    %204 = vector.broadcast %203 : vector<16x1xf32> to vector<16x384xf32>
    %205 = arith.addf %201, %204 : vector<16x384xf32>
    %cst_4 = arith.constant 0.000000e+00 : f32
    %206 = vector.broadcast %cst_4 : f32 to vector<16x384xf32>
    %207 = arith.maximumf %205, %206 : vector<16x384xf32>
    %c0_5 = arith.constant 0 : index
    %c0_6 = arith.constant 0 : index
    %c0_7 = arith.constant 0 : index
    %208 = vector.load %arg3[%c0_5, %c0_6, %c0_7] : memref<1x16x384xf32, #tpu.memory_space<vmem>>, vector<1x16x384xf32>
    %209 = vector.shape_cast %208 : vector<1x16x384xf32> to vector<16x384xf32>
    %210 = vector.shape_cast %207 : vector<16x384xf32> to vector<1x16x384xf32>
    tpu.vector_store %arg3[%c0_5, %c0_6, %c0_7], %210 {strides = array<i32>} : memref<1x16x384xf32, #tpu.memory_space<vmem>>, vector<1x16x384xf32>,
    return
  }
  func.func @transform_0(%arg0: i32) -> (i32, i32, i32) {
    %c0_i32 = arith.constant 0 : i32
    %c0_i32_0 = arith.constant 0 : i32
    %c0_i32_1 = arith.constant 0 : i32
    return %arg0, %c0_i32, %c0_i32_0 : i32, i32, i32
  }
  func.func @transform_1(%arg0: i32) -> (i32, i32) {
    %c0_i32 = arith.constant 0 : i32
    %c0_i32_0 = arith.constant 0 : i32
    %c0_i32_1 = arith.constant 0 : i32
    return %c0_i32, %c0_i32_0 : i32, i32
  }
  func.func @transform_2(%arg0: i32) -> (i32, i32, i32) {
    %c0_i32 = arith.constant 0 : i32
    %c0_i32_0 = arith.constant 0 : i32
    %c0_i32_1 = arith.constant 0 : i32
    return %arg0, %c0_i32, %c0_i32_0 : i32, i32, i32
  }
}

</mosaic_0001>

<llo_original>
// kernel: conv_forward.1
$region0: #{conv_forward.1}
  #allocation0 [shape = 'u32[]', space=smem, size = 0x4, offset = 0x4, fixed_abs, tag = 'smem constant byte address 0x4 - core index']
  #allocation1 [shape = 'u32[144,128]{1,0:T(1,128)}', space=vmem, size = 0x12000, scoped, tag = 'internal scratch']
  %s0 = inlined_call_operand.vmem [shape: f32[2,1,512], index: 0, kind: input, shape index: {}]
  %s1 = inlined_call_operand.vmem [shape: f32[16,128], index: 1, kind: input, shape index: {}]
  %s2 = inlined_call_operand.vmem [shape: f32[2,16,384], index: 2, kind: output, shape index: {}]
  %s3 = sld [smem:[#allocation0]]
  $region41: #{conv_forward.1} parent=0
    _
  %s5 = ssub.s32 1, %s3
  %s6 = scalar_select 0, %s5, %s3
  loop: start=0, step=1, limit=4
  $region2: #{conv_forward.1} parent=0 // loop_pre_header
    _
  $region3: #{conv_forward.1} parent=0 // loop_header
    %s8 = sphi 0, %s12
    %p9 = scmp.ge.s32.totalorder %s8, 4
    %s18 = sphi 0, %s20
    %s21 = sphi 0, %s18
    %s22 = sphi 0, %s21
    %s38 = sphi 0, %s22
    %s42 = sphi 0, %s42
    %s44 = sphi 0, %s42
    %s45 = sphi 0, %s44
    %s59 = sphi 0, %s45
    %s65 = sphi 0, %s67
    %s68 = sphi 0, %s65
    %s69 = sphi 0, %s68
    %s85 = sphi 0, %s69
  $region4: #{conv_forward.1} parent=0 // loop_header_branch
    %11 = sbr.rel (%p9) target = $region8
  $region5: #{conv_forward.1} parent=0 // loop_body
    %s13 = ssub.s32 %s8, 1
    %s14 = ssub.s32 %s8, 2
    %s15 = sadd.s32 %s8, 1
    %s16 = ssub.s32 %s8, %s15
    %p17 = scmp.eq.s32.totalorder %s16, 0
    %s19 = sadd.s32 %s18, 1
    %s20 = scalar_select %p17, %s18, %s19
    %p23 = pneg %p17
    %p24 = scmp.eq.s32.totalorder %s8, 1
    %p25 = por %p23, %p24
    %p26 = scmp.ne.s32.totalorder %s18, %s21
    %p27 = scmp.eq.s32.totalorder %s8, 0
    %p28 = por %p26, %p27
    %p29 = scmp.ne.s32.totalorder %s18, %s21
    %p30 = scmp.eq.s32.totalorder %s13, 1
    %p31 = por %p29, %p30
    %p32 = scmp.ne.s32.totalorder %s21, %s22
    %p33 = scmp.eq.s32.totalorder %s13, 0
    %p34 = por %p32, %p33
    %p35 = scmp.ne.s32.totalorder %s21, %s22
    %p36 = scmp.eq.s32.totalorder %s14, 1
    %p37 = por %p35, %p36
    %p39 = scmp.ne.s32.totalorder %s22, %s38
    %p40 = scmp.eq.s32.totalorder %s14, 0
    %p41 = por %p39, %p40
    %s43 = sadd.s32 %s42, 1
    %p46 = scmp.eq.s32.totalorder %s8, 1
    %p47 = scmp.ne.s32.totalorder %s42, %s44
    %p48 = scmp.eq.s32.totalorder %s8, 0
    %p49 = por %p47, %p48
    %p50 = scmp.ne.s32.totalorder %s42, %s44
    %p51 = scmp.eq.s32.totalorder %s13, 1
    %p52 = por %p50, %p51
    %p53 = scmp.ne.s32.totalorder %s44, %s45
    %p54 = scmp.eq.s32.totalorder %s13, 0
    %p55 = por %p53, %p54
    %p56 = scmp.ne.s32.totalorder %s44, %s45
    %p57 = scmp.eq.s32.totalorder %s14, 1
    %p58 = por %p56, %p57
    %p60 = scmp.ne.s32.totalorder %s45, %s59
    %p61 = scmp.eq.s32.totalorder %s14, 0
    %p62 = por %p60, %p61
    %s63 = ssub.s32 %s8, %s15
    %p64 = scmp.eq.s32.totalorder %s63, 0
    %s66 = sadd.s32 %s65, 1
    %s67 = scalar_select %p64, %s65, %s66
    %p70 = pneg %p64
    %p71 = scmp.eq.s32.totalorder %s8, 1
    %p72 = por %p70, %p71
    %p73 = scmp.ne.s32.totalorder %s65, %s68
    %p74 = scmp.eq.s32.totalorder %s8, 0
    %p75 = por %p73, %p74
    %p76 = scmp.ne.s32.totalorder %s65, %s68
    %p77 = scmp.eq.s32.totalorder %s13, 1
    %p78 = por %p76, %p77
    %p79 = scmp.ne.s32.totalorder %s68, %s69
    %p80 = scmp.eq.s32.totalorder %s13, 0
    %p81 = por %p79, %p80
    %p82 = scmp.ne.s32.totalorder %s68, %s69
    %p83 = scmp.eq.s32.totalorder %s14, 1
    %p84 = por %p82, %p83
    %p86 = scmp.ne.s32.totalorder %s69, %s85
    %p87 = scmp.eq.s32.totalorder %s14, 0
    %p88 = por %p86, %p87
    %p89 = scmp.le.s32.totalorder 1, %s8
    %p90 = scmp.lt.s32.totalorder %s8, 3
    %p91 = pnand %p89, %p90
    %p92 = pneg %p91
    // Predicated region
    $region9: #{conv_forward.1} parent=5 // pred_check
      _
    $region10: #{conv_forward.1} parent=5 // pred_check_branch
      %94 = sbr.rel (%p91) target = $region12
    $region11: #{conv_forward.1} parent=5 // pred_region
      %s95 = ssub.s32 %s8, 1
      // Predicated region
      $region13: #{conv_forward.1} parent=11 // pred_check
        %p96 = pneg %p55
      $region14: #{conv_forward.1} parent=11 // pred_check_branch
        %98 = sbr.rel (%p96) target = $region16
      $region15: #{conv_forward.1} parent=11 // pred_region
        _
      $region16: #{conv_forward.1} parent=11 // pred_fallthru
        _
    $region12: #{conv_forward.1} parent=5 // pred_fallthru
      _
    %p99 = scmp.lt.s32.totalorder %s8, 2
    // Predicated region
    $region17: #{conv_forward.1} parent=5 // pred_check
      %p100 = pneg %p99
    $region18: #{conv_forward.1} parent=5 // pred_check_branch
      %102 = sbr.rel (%p100) target = $region20
    $region19: #{conv_forward.1} parent=5 // pred_region
      // Predicated region
      $region21: #{conv_forward.1} parent=19 // pred_check
        %p103 = pneg %p28
      $region22: #{conv_forward.1} parent=19 // pred_check_branch
        %105 = sbr.rel (%p103) target = $region24
      $region23: #{conv_forward.1} parent=19 // pred_region
        %p106 = scmp.lt.s32.totalorder %s8, 1
        %s107 = scalar_select %p106, %s8, 1
        %s108 = smul.addr %s107, 4
        %s109 = scalar_lea.vmem %s0, %s108
      $region24: #{conv_forward.1} parent=19 // pred_fallthru
        _
    $region20: #{conv_forward.1} parent=5 // pred_fallthru
      _
    %p110 = scmp.le.s32.totalorder 1, %s8
    %p111 = scmp.lt.s32.totalorder %s8, 3
    %p112 = pnand %p110, %p111
    %p113 = pneg %p112
    // Predicated region
    $region25: #{conv_forward.1} parent=5 // pred_check
      _
    $region26: #{conv_forward.1} parent=5 // pred_check_branch
      %115 = sbr.rel (%p112) target = $region28
    $region27: #{conv_forward.1} parent=5 // pred_region
      %s116 = ssub.s32 %s8, 1
      %p117 = scmp.lt.s32.totalorder %s13, 1
      %s118 = scalar_select %p117, %s13, 1
      %s119 = smul.addr %s118, 4
      %s120 = scalar_lea.vmem %s0, %s119
      %p121 = pneg %p34
      %p122 = pneg %p31
      %p123 = pneg %p55
      %p124 = pneg %p52
      %p125 = pneg %p81
      %p126 = pneg %p78
      %p127 = scmp.lt.s32.totalorder %s13, 1
      %s128 = scalar_select %p127, %s13, 1
      %s129 = smul.addr %s128, 6
      %s130 = smul.addr %s129, 8
      %s131 = scalar_lea.vmem %s2, %s130
      %p132 = scmp.lt.s32.totalorder %s13, 1
      %s133 = scalar_select %p132, %s13, 1
      %s134 = smul.addr %s133, 4
      %s135 = scalar_lea.vmem %s0, %s134
      %p136 = scmp.lt.s32.totalorder %s13, 1
      %s137 = scalar_select %p136, %s13, 1
      %s138 = smul.addr %s137, 6
      %s139 = smul.addr %s138, 8
      %s140 = scalar_lea.vmem %s2, %s139
      %v141 = vld [vmem:[%s135] sm:$0xf]
      %v142 = vld [vmem:[%s1] sm:$0xff]
      %v143 = vld [vmem:[%s1 + $0x8] sm:$0xff]
      %145 = vset.pattern.permute.xlu0 0
      %146 = vperm.xlu0 %145, %v142
      %v147 = vpop.permute.xlu0 %146
      %150 = vset.pattern.permute.xlu0 0
      %151 = vperm.xlu0 %150, %v143
      %v152 = vpop.permute.xlu0 %151
      %v155 = vlaneseq
      %v156 = vshrl.u32 %v155, 7
      %v157 = vsub.s32 0, %v156
      %v158 = vrot.slane %v141, %v157
      %v159 = vlaneseq
      %v160 = vshrl.u32 %v159, 7
      %v161 = vsub.s32 1, %v160
      %v162 = vrot.slane %v141, %v161
      %v163 = vlaneseq
      %v164 = vshrl.u32 %v163, 7
      %v165 = vsub.s32 2, %v164
      %v166 = vrot.slane %v141, %v165
      %v170 = vmul.f32 %v147, %v158
      %v171 = vmul.f32 %v147, %v162
      %v172 = vmul.f32 %v147, %v166
      %v173 = vmul.f32 %v152, %v158
      %v174 = vmul.f32 %v152, %v162
      %v175 = vmul.f32 %v152, %v166
      %v176 = vadd.f32 %v170, 0.0
      %v177 = vadd.f32 %v171, 0.0
      %v178 = vadd.f32 %v172, 0.0
      %v179 = vadd.f32 %v173, 0.0
      %v180 = vadd.f32 %v174, 0.0
      %v181 = vadd.f32 %v175, 0.0
      %v182 = vlaneseq
      %v183 = vshrl.u32 %v182, 7
      %v184 = vsub.s32 3, %v183
      %v185 = vrot.slane %v141, %v184
      %187 = vrot.lane.b32.xlu0 %v158, 127
      %v188 = vpop.permute.xlu0 %187
      %189 = vrot.lane.b32.xlu0 %v162, 127
      %v190 = vpop.permute.xlu0 %189
      %191 = vrot.lane.b32.xlu0 %v166, 127
      %v192 = vpop.permute.xlu0 %191
      %193 = vrot.lane.b32.xlu0 %v185, 127
      %v194 = vpop.permute.xlu0 %193
      %v195 = vlaneseq
      %v196 = vand.u32 %v195, 127
      %vm197 = vcmp.lt.s32.totalorder %v196, 127
      %v198 = vsel %vm197, %v192, %v194
      %v199 = vsel %vm197, %v190, %v192
      %v200 = vsel %vm197, %v188, %v190
      %201 = vrot.lane.b32.xlu0 %v142, 127
      %v202 = vpop.permute.xlu0 %201
      %203 = vrot.lane.b32.xlu0 %v143, 127
      %v204 = vpop.permute.xlu0 %203
      %206 = vset.pattern.permute.xlu0 0
      %207 = vperm.xlu0 %206, %v202
      %v208 = vpop.permute.xlu0 %207
      %211 = vset.pattern.permute.xlu0 0
      %212 = vperm.xlu0 %211, %v204
      %v213 = vpop.permute.xlu0 %212
      %v215 = vlaneseq
      %v216 = vshrl.u32 %v215, 7
      %v217 = vsub.s32 0, %v216
      %v218 = vrot.slane %v200, %v217
      %v219 = vlaneseq
      %v220 = vshrl.u32 %v219, 7
      %v221 = vsub.s32 0, %v220
      %v222 = vrot.slane %v199, %v221
      %v223 = vlaneseq
      %v224 = vshrl.u32 %v223, 7
      %v225 = vsub.s32 0, %v224
      %v226 = vrot.slane %v198, %v225
      %v227 = vmul.f32 %v208, %v218
      %v228 = vmul.f32 %v208, %v222
      %v229 = vmul.f32 %v208, %v226
      %v230 = vmul.f32 %v213, %v218
      %v231 = vmul.f32 %v213, %v222
      %v232 = vmul.f32 %v213, %v226
      %v233 = vadd.f32 %v176, %v227
      %v234 = vadd.f32 %v177, %v228
      %v235 = vadd.f32 %v178, %v229
      %v236 = vadd.f32 %v179, %v230
      %v237 = vadd.f32 %v180, %v231
      %v238 = vadd.f32 %v181, %v232
      %239 = vrot.lane.b32.xlu0 %v158, 126
      %v240 = vpop.permute.xlu0 %239
      %241 = vrot.lane.b32.xlu0 %v162, 126
      %v242 = vpop.permute.xlu0 %241
      %243 = vrot.lane.b32.xlu0 %v166, 126
      %v244 = vpop.permute.xlu0 %243
      %245 = vrot.lane.b32.xlu0 %v185, 126
      %v246 = vpop.permute.xlu0 %245
      %vm247 = vcmp.lt.s32.totalorder %v196, 126
      %v248 = vsel %vm247, %v244, %v246
      %v249 = vsel %vm247, %v242, %v244
      %v250 = vsel %vm247, %v240, %v242
      %251 = vrot.lane.b32.xlu0 %v142, 126
      %v252 = vpop.permute.xlu0 %251
      %253 = vrot.lane.b32.xlu0 %v143, 126
      %v254 = vpop.permute.xlu0 %253
      %256 = vset.pattern.permute.xlu0 0
      %257 = vperm.xlu0 %256, %v252
      %v258 = vpop.permute.xlu0 %257
      %261 = vset.pattern.permute.xlu0 0
      %262 = vperm.xlu0 %261, %v254
      %v263 = vpop.permute.xlu0 %262
      %v265 = vlaneseq
      %v266 = vshrl.u32 %v265, 7
      %v267 = vsub.s32 0, %v266
      %v268 = vrot.slane %v250, %v267
      %v269 = vlaneseq
      %v270 = vshrl.u32 %v269, 7
      %v271 = vsub.s32 0, %v270
      %v272 = vrot.slane %v249, %v271
      %v273 = vlaneseq
      %v274 = vshrl.u32 %v273, 7
      %v275 = vsub.s32 0, %v274
      %v276 = vrot.slane %v248, %v275
      %v277 = vmul.f32 %v258, %v268
      %v278 = vmul.f32 %v258, %v272
      %v279 = vmul.f32 %v258, %v276
      %v280 = vmul.f32 %v263, %v268
      %v281 = vmul.f32 %v263, %v272
      %v282 = vmul.f32 %v263, %v276
      %v283 = vadd.f32 %v233, %v277
      %v284 = vadd.f32 %v234, %v278
      %v285 = vadd.f32 %v235, %v279
      %v286 = vadd.f32 %v236, %v280
      %v287 = vadd.f32 %v237, %v281
      %v288 = vadd.f32 %v238, %v282
      %289 = vrot.lane.b32.xlu0 %v158, 125
      %v290 = vpop.permute.xlu0 %289
      %291 = vrot.lane.b32.xlu0 %v162, 125
      %v292 = vpop.permute.xlu0 %291
      %293 = vrot.lane.b32.xlu0 %v166, 125
      %v294 = vpop.permute.xlu0 %293
      %295 = vrot.lane.b32.xlu0 %v185, 125
      %v296 = vpop.permute.xlu0 %295
      %vm297 = vcmp.lt.s32.totalorder %v196, 125
      %v298 = vsel %vm297, %v294, %v296
      %v299 = vsel %vm297, %v292, %v294
      %v300 = vsel %vm297, %v290, %v292
      %301 = vrot.lane.b32.xlu0 %v142, 125
      %v302 = vpop.permute.xlu0 %301
      %303 = vrot.lane.b32.xlu0 %v143, 125
      %v304 = vpop.permute.xlu0 %303
      %306 = vset.pattern.permute.xlu0 0
      %307 = vperm.xlu0 %306, %v302
      %v308 = vpop.permute.xlu0 %307
      %311 = vset.pattern.permute.xlu0 0
      %312 = vperm.xlu0 %311, %v304
      %v313 = vpop.permute.xlu0 %312
      %v315 = vlaneseq
      %v316 = vshrl.u32 %v315, 7
      %v317 = vsub.s32 0, %v316
      %v318 = vrot.slane %v300, %v317
      %v319 = vlaneseq
      %v320 = vshrl.u32 %v319, 7
      %v321 = vsub.s32 0, %v320
      %v322 = vrot.slane %v299, %v321
      %v323 = vlaneseq
      %v324 = vshrl.u32 %v323, 7
      %v325 = vsub.s32 0, %v324
      %v326 = vrot.slane %v298, %v325
      %v327 = vmul.f32 %v308, %v318
      %v328 = vmul.f32 %v308, %v322
      %v329 = vmul.f32 %v308, %v326
      %v330 = vmul.f32 %v313, %v318
      %v331 = vmul.f32 %v313, %v322
      %v332 = vmul.f32 %v313, %v326
      %v333 = vadd.f32 %v283, %v327
      %v334 = vadd.f32 %v284, %v328
      %v335 = vadd.f32 %v285, %v329
      %v336 = vadd.f32 %v286, %v330
      %v337 = vadd.f32 %v287, %v331
      %v338 = vadd.f32 %v288, %v332
      %339 = vrot.lane.b32.xlu0 %v158, 124
      %v340 = vpop.permute.xlu0 %339
      %341 = vrot.lane.b32.xlu0 %v162, 124
      %v342 = vpop.permute.xlu0 %341
      %343 = vrot.lane.b32.xlu0 %v166, 124
      %v344 = vpop.permute.xlu0 %343
      %345 = vrot.lane.b32.xlu0 %v185, 124
      %v346 = vpop.permute.xlu0 %345
      %vm347 = vcmp.lt.s32.totalorder %v196, 124
      %v348 = vsel %vm347, %v344, %v346
      %v349 = vsel %vm347, %v342, %v344
      %v350 = vsel %vm347, %v340, %v342
      %351 = vrot.lane.b32.xlu0 %v142, 124
      %v352 = vpop.permute.xlu0 %351
      %353 = vrot.lane.b32.xlu0 %v143, 124
      %v354 = vpop.permute.xlu0 %353
      %356 = vset.pattern.permute.xlu0 0
      %357 = vperm.xlu0 %356, %v352
      %v358 = vpop.permute.xlu0 %357
      %361 = vset.pattern.permute.xlu0 0
      %362 = vperm.xlu0 %361, %v354
      %v363 = vpop.permute.xlu0 %362
      %v365 = vlaneseq
      %v366 = vshrl.u32 %v365, 7
      %v367 = vsub.s32 0, %v366
      %v368 = vrot.slane %v350, %v367
      %v369 = vlaneseq
      %v370 = vshrl.u32 %v369, 7
      %v371 = vsub.s32 0, %v370
      %v372 = vrot.slane %v349, %v371
      %v373 = vlaneseq
      %v374 = vshrl.u32 %v373, 7
      %v375 = vsub.s32 0, %v374
      %v376 = vrot.slane %v348, %v375
      %v377 = vmul.f32 %v358, %v368
      %v378 = vmul.f32 %v358, %v372
      %v379 = vmul.f32 %v358, %v376
      %v380 = vmul.f32 %v363, %v368
      %v381 = vmul.f32 %v363, %v372
      %v382 = vmul.f32 %v363, %v376
      %v383 = vadd.f32 %v333, %v377
      %v384 = vadd.f32 %v334, %v378
      %v385 = vadd.f32 %v335, %v379
      %v386 = vadd.f32 %v336, %v380
      %v387 = vadd.f32 %v337, %v381
      %v388 = vadd.f32 %v338, %v382
      %389 = vrot.lane.b32.xlu0 %v158, 108
      %v390 = vpop.permute.xlu0 %389
      %391 = vrot.lane.b32.xlu0 %v162, 108
      %v392 = vpop.permute.xlu0 %391
      %393 = vrot.lane.b32.xlu0 %v166, 108
      %v394 = vpop.permute.xlu0 %393
      %395 = vrot.lane.b32.xlu0 %v185, 108
      %v396 = vpop.permute.xlu0 %395
      %vm397 = vcmp.lt.s32.totalorder %v196, 108
      %v398 = vsel %vm397, %v394, %v396
      %v399 = vsel %vm397, %v392, %v394
      %v400 = vsel %vm397, %v390, %v392
      %401 = vrot.lane.b32.xlu0 %v142, 123
      %v402 = vpop.permute.xlu0 %401
      %403 = vrot.lane.b32.xlu0 %v143, 123
      %v404 = vpop.permute.xlu0 %403
      %406 = vset.pattern.permute.xlu0 0
      %407 = vperm.xlu0 %406, %v402
      %v408 = vpop.permute.xlu0 %407
      %411 = vset.pattern.permute.xlu0 0
      %412 = vperm.xlu0 %411, %v404
      %v413 = vpop.permute.xlu0 %412
      %v415 = vlaneseq
      %v416 = vshrl.u32 %v415, 7
      %v417 = vsub.s32 0, %v416
      %v418 = vrot.slane %v400, %v417
      %v419 = vlaneseq
      %v420 = vshrl.u32 %v419, 7
      %v421 = vsub.s32 0, %v420
      %v422 = vrot.slane %v399, %v421
      %v423 = vlaneseq
      %v424 = vshrl.u32 %v423, 7
      %v425 = vsub.s32 0, %v424
      %v426 = vrot.slane %v398, %v425
      %v427 = vmul.f32 %v408, %v418
      %v428 = vmul.f32 %v408, %v422
      %v429 = vmul.f32 %v408, %v426
      %v430 = vmul.f32 %v413, %v418
      %v431 = vmul.f32 %v413, %v422
      %v432 = vmul.f32 %v413, %v426
      %v433 = vadd.f32 %v383, %v427
      %v434 = vadd.f32 %v384, %v428
      %v435 = vadd.f32 %v385, %v429
      %v436 = vadd.f32 %v386, %v430
      %v437 = vadd.f32 %v387, %v431
      %v438 = vadd.f32 %v388, %v432
      %439 = vrot.lane.b32.xlu0 %v158, 107
      %v440 = vpop.permute.xlu0 %439
      %441 = vrot.lane.b32.xlu0 %v162, 107
      %v442 = vpop.permute.xlu0 %441
      %443 = vrot.lane.b32.xlu0 %v166, 107
      %v444 = vpop.permute.xlu0 %443
      %445 = vrot.lane.b32.xlu0 %v185, 107
      %v446 = vpop.permute.xlu0 %445
      %vm447 = vcmp.lt.s32.totalorder %v196, 107
      %v448 = vsel %vm447, %v444, %v446
      %v449 = vsel %vm447, %v442, %v444
      %v450 = vsel %vm447, %v440, %v442
      %451 = vrot.lane.b32.xlu0 %v142, 122
      %v452 = vpop.permute.xlu0 %451
      %453 = vrot.lane.b32.xlu0 %v143, 122
      %v454 = vpop.permute.xlu0 %453
      %456 = vset.pattern.permute.xlu0 0
      %457 = vperm.xlu0 %456, %v452
      %v458 = vpop.permute.xlu0 %457
      %461 = vset.pattern.permute.xlu0 0
      %462 = vperm.xlu0 %461, %v454
      %v463 = vpop.permute.xlu0 %462
      %v465 = vlaneseq
      %v466 = vshrl.u32 %v465, 7
      %v467 = vsub.s32 0, %v466
      %v468 = vrot.slane %v450, %v467
      %v469 = vlaneseq
      %v470 = vshrl.u32 %v469, 7
      %v471 = vsub.s32 0, %v470
      %v472 = vrot.slane %v449, %v471
      %v473 = vlaneseq
      %v474 = vshrl.u32 %v473, 7
      %v475 = vsub.s32 0, %v474
      %v476 = vrot.slane %v448, %v475
      %v477 = vmul.f32 %v458, %v468
      %v478 = vmul.f32 %v458, %v472
      %v479 = vmul.f32 %v458, %v476
      %v480 = vmul.f32 %v463, %v468
      %v481 = vmul.f32 %v463, %v472
      %v482 = vmul.f32 %v463, %v476
      %v483 = vadd.f32 %v433, %v477
      %v484 = vadd.f32 %v434, %v478
      %v485 = vadd.f32 %v435, %v479
      %v486 = vadd.f32 %v436, %v480
      %v487 = vadd.f32 %v437, %v481
      %v488 = vadd.f32 %v438, %v482
      %489 = vrot.lane.b32.xlu0 %v158, 106
      %v490 = vpop.permute.xlu0 %489
      %491 = vrot.lane.b32.xlu0 %v162, 106
      %v492 = vpop.permute.xlu0 %491
      %493 = vrot.lane.b32.xlu0 %v166, 106
      %v494 = vpop.permute.xlu0 %493
      %495 = vrot.lane.b32.xlu0 %v185, 106
      %v496 = vpop.permute.xlu0 %495
      %vm497 = vcmp.lt.s32.totalorder %v196, 106
      %v498 = vsel %vm497, %v494, %v496
      %v499 = vsel %vm497, %v492, %v494
      %v500 = vsel %vm497, %v490, %v492
      %501 = vrot.lane.b32.xlu0 %v142, 121
      %v502 = vpop.permute.xlu0 %501
      %503 = vrot.lane.b32.xlu0 %v143, 121
      %v504 = vpop.permute.xlu0 %503
      %506 = vset.pattern.permute.xlu0 0
      %507 = vperm.xlu0 %506, %v502
      %v508 = vpop.permute.xlu0 %507
      %511 = vset.pattern.permute.xlu0 0
      %512 = vperm.xlu0 %511, %v504
      %v513 = vpop.permute.xlu0 %512
      %v515 = vlaneseq
      %v516 = vshrl.u32 %v515, 7
      %v517 = vsub.s32 0, %v516
      %v518 = vrot.slane %v500, %v517
      %v519 = vlaneseq
      %v520 = vshrl.u32 %v519, 7
      %v521 = vsub.s32 0, %v520
      %v522 = vrot.slane %v499, %v521
      %v523 = vlaneseq
      %v524 = vshrl.u32 %v523, 7
      %v525 = vsub.s32 0, %v524
      %v526 = vrot.slane %v498, %v525
      %v527 = vmul.f32 %v508, %v518
      %v528 = vmul.f32 %v508, %v522
      %v529 = vmul.f32 %v508, %v526
      %v530 = vmul.f32 %v513, %v518
      %v531 = vmul.f32 %v513, %v522
      %v532 = vmul.f32 %v513, %v526
      %v533 = vadd.f32 %v483, %v527
      %v534 = vadd.f32 %v484, %v528
      %v535 = vadd.f32 %v485, %v529
      %v536 = vadd.f32 %v486, %v530
      %v537 = vadd.f32 %v487, %v531
      %v538 = vadd.f32 %v488, %v532
      %539 = vrot.lane.b32.xlu0 %v158, 105
      %v540 = vpop.permute.xlu0 %539
      %541 = vrot.lane.b32.xlu0 %v162, 105
      %v542 = vpop.permute.xlu0 %541
      %543 = vrot.lane.b32.xlu0 %v166, 105
      %v544 = vpop.permute.xlu0 %543
      %545 = vrot.lane.b32.xlu0 %v185, 105
      %v546 = vpop.permute.xlu0 %545
      %vm547 = vcmp.lt.s32.totalorder %v196, 105
      %v548 = vsel %vm547, %v544, %v546
      %v549 = vsel %vm547, %v542, %v544
      %v550 = vsel %vm547, %v540, %v542
      %551 = vrot.lane.b32.xlu0 %v142, 120
      %v552 = vpop.permute.xlu0 %551
      %553 = vrot.lane.b32.xlu0 %v143, 120
      %v554 = vpop.permute.xlu0 %553
      %556 = vset.pattern.permute.xlu0 0
      %557 = vperm.xlu0 %556, %v552
      %v558 = vpop.permute.xlu0 %557
      %561 = vset.pattern.permute.xlu0 0
      %562 = vperm.xlu0 %561, %v554
      %v563 = vpop.permute.xlu0 %562
      %v565 = vlaneseq
      %v566 = vshrl.u32 %v565, 7
      %v567 = vsub.s32 0, %v566
      %v568 = vrot.slane %v550, %v567
      %v569 = vlaneseq
      %v570 = vshrl.u32 %v569, 7
      %v571 = vsub.s32 0, %v570
      %v572 = vrot.slane %v549, %v571
      %v573 = vlaneseq
      %v574 = vshrl.u32 %v573, 7
      %v575 = vsub.s32 0, %v574
      %v576 = vrot.slane %v548, %v575
      %v577 = vmul.f32 %v558, %v568
      %v578 = vmul.f32 %v558, %v572
      %v579 = vmul.f32 %v558, %v576
      %v580 = vmul.f32 %v563, %v568
      %v581 = vmul.f32 %v563, %v572
      %v582 = vmul.f32 %v563, %v576
      %v583 = vadd.f32 %v533, %v577
      %v584 = vadd.f32 %v534, %v578
      %v585 = vadd.f32 %v535, %v579
      %v586 = vadd.f32 %v536, %v580
      %v587 = vadd.f32 %v537, %v581
      %v588 = vadd.f32 %v538, %v582
      %589 = vrot.lane.b32.xlu0 %v158, 104
      %v590 = vpop.permute.xlu0 %589
      %591 = vrot.lane.b32.xlu0 %v162, 104
      %v592 = vpop.permute.xlu0 %591
      %593 = vrot.lane.b32.xlu0 %v166, 104
      %v594 = vpop.permute.xlu0 %593
      %595 = vrot.lane.b32.xlu0 %v185, 104
      %v596 = vpop.permute.xlu0 %595
      %vm597 = vcmp.lt.s32.totalorder %v196, 104
      %v598 = vsel %vm597, %v594, %v596
      %v599 = vsel %vm597, %v592, %v594
      %v600 = vsel %vm597, %v590, %v592
      %601 = vrot.lane.b32.xlu0 %v142, 119
      %v602 = vpop.permute.xlu0 %601
      %603 = vrot.lane.b32.xlu0 %v143, 119
      %v604 = vpop.permute.xlu0 %603
      %606 = vset.pattern.permute.xlu0 0
      %607 = vperm.xlu0 %606, %v602
      %v608 = vpop.permute.xlu0 %607
      %611 = vset.pattern.permute.xlu0 0
      %612 = vperm.xlu0 %611, %v604
      %v613 = vpop.permute.xlu0 %612
      %v615 = vlaneseq
      %v616 = vshrl.u32 %v615, 7
      %v617 = vsub.s32 0, %v616
      %v618 = vrot.slane %v600, %v617
      %v619 = vlaneseq
      %v620 = vshrl.u32 %v619, 7
      %v621 = vsub.s32 0, %v620
      %v622 = vrot.slane %v599, %v621
      %v623 = vlaneseq
      %v624 = vshrl.u32 %v623, 7
      %v625 = vsub.s32 0, %v624
      %v626 = vrot.slane %v598, %v625
      %v627 = vmul.f32 %v608, %v618
      %v628 = vmul.f32 %v608, %v622
      %v629 = vmul.f32 %v608, %v626
      %v630 = vmul.f32 %v613, %v618
      %v631 = vmul.f32 %v613, %v622
      %v632 = vmul.f32 %v613, %v626
      %v633 = vadd.f32 %v583, %v627
      %v634 = vadd.f32 %v584, %v628
      %v635 = vadd.f32 %v585, %v629
      %v636 = vadd.f32 %v586, %v630
      %v637 = vadd.f32 %v587, %v631
      %v638 = vadd.f32 %v588, %v632
      %639 = vrot.lane.b32.xlu0 %v158, 88
      %v640 = vpop.permute.xlu0 %639
      %641 = vrot.lane.b32.xlu0 %v162, 88
      %v642 = vpop.permute.xlu0 %641
      %643 = vrot.lane.b32.xlu0 %v166, 88
      %v644 = vpop.permute.xlu0 %643
      %645 = vrot.lane.b32.xlu0 %v185, 88
      %v646 = vpop.permute.xlu0 %645
      %vm647 = vcmp.lt.s32.totalorder %v196, 88
      %v648 = vsel %vm647, %v644, %v646
      %v649 = vsel %vm647, %v642, %v644
      %v650 = vsel %vm647, %v640, %v642
      %651 = vrot.lane.b32.xlu0 %v142, 118
      %v652 = vpop.permute.xlu0 %651
      %653 = vrot.lane.b32.xlu0 %v143, 118
      %v654 = vpop.permute.xlu0 %653
      %656 = vset.pattern.permute.xlu0 0
      %657 = vperm.xlu0 %656, %v652
      %v658 = vpop.permute.xlu0 %657
      %661 = vset.pattern.permute.xlu0 0
      %662 = vperm.xlu0 %661, %v654
      %v663 = vpop.permute.xlu0 %662
      %v665 = vlaneseq
      %v666 = vshrl.u32 %v665, 7
      %v667 = vsub.s32 0, %v666
      %v668 = vrot.slane %v650, %v667
      %v669 = vlaneseq
      %v670 = vshrl.u32 %v669, 7
      %v671 = vsub.s32 0, %v670
      %v672 = vrot.slane %v649, %v671
      %v673 = vlaneseq
      %v674 = vshrl.u32 %v673, 7
      %v675 = vsub.s32 0, %v674
      %v676 = vrot.slane %v648, %v675
      %v677 = vmul.f32 %v658, %v668
      %v678 = vmul.f32 %v658, %v672
      %v679 = vmul.f32 %v658, %v676
      %v680 = vmul.f32 %v663, %v668
      %v681 = vmul.f32 %v663, %v672
      %v682 = vmul.f32 %v663, %v676
      %v683 = vadd.f32 %v633, %v677
      %v684 = vadd.f32 %v634, %v678
      %v685 = vadd.f32 %v635, %v679
      %v686 = vadd.f32 %v636, %v680
      %v687 = vadd.f32 %v637, %v681
      %v688 = vadd.f32 %v638, %v682
      %689 = vrot.lane.b32.xlu0 %v158, 87
      %v690 = vpop.permute.xlu0 %689
      %691 = vrot.lane.b32.xlu0 %v162, 87
      %v692 = vpop.permute.xlu0 %691
      %693 = vrot.lane.b32.xlu0 %v166, 87
      %v694 = vpop.permute.xlu0 %693
      %695 = vrot.lane.b32.xlu0 %v185, 87
      %v696 = vpop.permute.xlu0 %695
      %vm697 = vcmp.lt.s32.totalorder %v196, 87
      %v698 = vsel %vm697, %v694, %v696
      %v699 = vsel %vm697, %v692, %v694
      %v700 = vsel %vm697, %v690, %v692
      %701 = vrot.lane.b32.xlu0 %v142, 117
      %v702 = vpop.permute.xlu0 %701
      %703 = vrot.lane.b32.xlu0 %v143, 117
      %v704 = vpop.permute.xlu0 %703
      %706 = vset.pattern.permute.xlu0 0
      %707 = vperm.xlu0 %706, %v702
      %v708 = vpop.permute.xlu0 %707
      %711 = vset.pattern.permute.xlu0 0
      %712 = vperm.xlu0 %711, %v704
      %v713 = vpop.permute.xlu0 %712
      %v715 = vlaneseq
      %v716 = vshrl.u32 %v715, 7
      %v717 = vsub.s32 0, %v716
      %v718 = vrot.slane %v700, %v717
      %v719 = vlaneseq
      %v720 = vshrl.u32 %v719, 7
      %v721 = vsub.s32 0, %v720
      %v722 = vrot.slane %v699, %v721
      %v723 = vlaneseq
      %v724 = vshrl.u32 %v723, 7
      %v725 = vsub.s32 0, %v724
      %v726 = vrot.slane %v698, %v725
      %v727 = vmul.f32 %v708, %v718
      %v728 = vmul.f32 %v708, %v722
      %v729 = vmul.f32 %v708, %v726
      %v730 = vmul.f32 %v713, %v718
      %v731 = vmul.f32 %v713, %v722
      %v732 = vmul.f32 %v713, %v726
      %v733 = vadd.f32 %v683, %v727
      %v734 = vadd.f32 %v684, %v728
      %v735 = vadd.f32 %v685, %v729
      %v736 = vadd.f32 %v686, %v730
      %v737 = vadd.f32 %v687, %v731
      %v738 = vadd.f32 %v688, %v732
      %739 = vrot.lane.b32.xlu0 %v158, 86
      %v740 = vpop.permute.xlu0 %739
      %741 = vrot.lane.b32.xlu0 %v162, 86
      %v742 = vpop.permute.xlu0 %741
      %743 = vrot.lane.b32.xlu0 %v166, 86
      %v744 = vpop.permute.xlu0 %743
      %745 = vrot.lane.b32.xlu0 %v185, 86
      %v746 = vpop.permute.xlu0 %745
      %vm747 = vcmp.lt.s32.totalorder %v196, 86
      %v748 = vsel %vm747, %v744, %v746
      %v749 = vsel %vm747, %v742, %v744
      %v750 = vsel %vm747, %v740, %v742
      %751 = vrot.lane.b32.xlu0 %v142, 116
      %v752 = vpop.permute.xlu0 %751
      %753 = vrot.lane.b32.xlu0 %v143, 116
      %v754 = vpop.permute.xlu0 %753
      %756 = vset.pattern.permute.xlu0 0
      %757 = vperm.xlu0 %756, %v752
      %v758 = vpop.permute.xlu0 %757
      %761 = vset.pattern.permute.xlu0 0
      %762 = vperm.xlu0 %761, %v754
      %v763 = vpop.permute.xlu0 %762
      %v765 = vlaneseq
      %v766 = vshrl.u32 %v765, 7
      %v767 = vsub.s32 0, %v766
      %v768 = vrot.slane %v750, %v767
      %v769 = vlaneseq
      %v770 = vshrl.u32 %v769, 7
      %v771 = vsub.s32 0, %v770
      %v772 = vrot.slane %v749, %v771
      %v773 = vlaneseq
      %v774 = vshrl.u32 %v773, 7
      %v775 = vsub.s32 0, %v774
      %v776 = vrot.slane %v748, %v775
      %v777 = vmul.f32 %v758, %v768
      %v778 = vmul.f32 %v758, %v772
      %v779 = vmul.f32 %v758, %v776
      %v780 = vmul.f32 %v763, %v768
      %v781 = vmul.f32 %v763, %v772
      %v782 = vmul.f32 %v763, %v776
      %v783 = vadd.f32 %v733, %v777
      %v784 = vadd.f32 %v734, %v778
      %v785 = vadd.f32 %v735, %v779
      %v786 = vadd.f32 %v736, %v780
      %v787 = vadd.f32 %v737, %v781
      %v788 = vadd.f32 %v738, %v782
      %789 = vrot.lane.b32.xlu0 %v158, 85
      %v790 = vpop.permute.xlu0 %789
      %791 = vrot.lane.b32.xlu0 %v162, 85
      %v792 = vpop.permute.xlu0 %791
      %793 = vrot.lane.b32.xlu0 %v166, 85
      %v794 = vpop.permute.xlu0 %793
      %795 = vrot.lane.b32.xlu0 %v185, 85
      %v796 = vpop.permute.xlu0 %795
      %vm797 = vcmp.lt.s32.totalorder %v196, 85
      %v798 = vsel %vm797, %v794, %v796
      %v799 = vsel %vm797, %v792, %v794
      %v800 = vsel %vm797, %v790, %v792
      %801 = vrot.lane.b32.xlu0 %v142, 115
      %v802 = vpop.permute.xlu0 %801
      %803 = vrot.lane.b32.xlu0 %v143, 115
      %v804 = vpop.permute.xlu0 %803
      %806 = vset.pattern.permute.xlu0 0
      %807 = vperm.xlu0 %806, %v802
      %v808 = vpop.permute.xlu0 %807
      %811 = vset.pattern.permute.xlu0 0
      %812 = vperm.xlu0 %811, %v804
      %v813 = vpop.permute.xlu0 %812
      %v815 = vlaneseq
      %v816 = vshrl.u32 %v815, 7
      %v817 = vsub.s32 0, %v816
      %v818 = vrot.slane %v800, %v817
      %v819 = vlaneseq
      %v820 = vshrl.u32 %v819, 7
      %v821 = vsub.s32 0, %v820
      %v822 = vrot.slane %v799, %v821
      %v823 = vlaneseq
      %v824 = vshrl.u32 %v823, 7
      %v825 = vsub.s32 0, %v824
      %v826 = vrot.slane %v798, %v825
      %v827 = vmul.f32 %v808, %v818
      %v828 = vmul.f32 %v808, %v822
      %v829 = vmul.f32 %v808, %v826
      %v830 = vmul.f32 %v813, %v818
      %v831 = vmul.f32 %v813, %v822
      %v832 = vmul.f32 %v813, %v826
      %v833 = vadd.f32 %v783, %v827
      %v834 = vadd.f32 %v784, %v828
      %v835 = vadd.f32 %v785, %v829
      %v836 = vadd.f32 %v786, %v830
      %v837 = vadd.f32 %v787, %v831
      %v838 = vadd.f32 %v788, %v832
      %839 = vrot.lane.b32.xlu0 %v158, 84
      %v840 = vpop.permute.xlu0 %839
      %841 = vrot.lane.b32.xlu0 %v162, 84
      %v842 = vpop.permute.xlu0 %841
      %843 = vrot.lane.b32.xlu0 %v166, 84
      %v844 = vpop.permute.xlu0 %843
      %845 = vrot.lane.b32.xlu0 %v185, 84
      %v846 = vpop.permute.xlu0 %845
      %vm847 = vcmp.lt.s32.totalorder %v196, 84
      %v848 = vsel %vm847, %v844, %v846
      %v849 = vsel %vm847, %v842, %v844
      %v850 = vsel %vm847, %v840, %v842
      %851 = vrot.lane.b32.xlu0 %v142, 114
      %v852 = vpop.permute.xlu0 %851
      %853 = vrot.lane.b32.xlu0 %v143, 114
      %v854 = vpop.permute.xlu0 %853
      %856 = vset.pattern.permute.xlu0 0
      %857 = vperm.xlu0 %856, %v852
      %v858 = vpop.permute.xlu0 %857
      %861 = vset.pattern.permute.xlu0 0
      %862 = vperm.xlu0 %861, %v854
      %v863 = vpop.permute.xlu0 %862
      %v865 = vlaneseq
      %v866 = vshrl.u32 %v865, 7
      %v867 = vsub.s32 0, %v866
      %v868 = vrot.slane %v850, %v867
      %v869 = vlaneseq
      %v870 = vshrl.u32 %v869, 7
      %v871 = vsub.s32 0, %v870
      %v872 = vrot.slane %v849, %v871
      %v873 = vlaneseq
      %v874 = vshrl.u32 %v873, 7
      %v875 = vsub.s32 0, %v874
      %v876 = vrot.slane %v848, %v875
      %v877 = vmul.f32 %v858, %v868
      %v878 = vmul.f32 %v858, %v872
      %v879 = vmul.f32 %v858, %v876
      %v880 = vmul.f32 %v863, %v868
      %v881 = vmul.f32 %v863, %v872
      %v882 = vmul.f32 %v863, %v876
      %v883 = vadd.f32 %v833, %v877
      %v884 = vadd.f32 %v834, %v878
      %v885 = vadd.f32 %v835, %v879
      %v886 = vadd.f32 %v836, %v880
      %v887 = vadd.f32 %v837, %v881
      %v888 = vadd.f32 %v838, %v882
      %889 = vrot.lane.b32.xlu0 %v158, 68
      %v890 = vpop.permute.xlu0 %889
      %891 = vrot.lane.b32.xlu0 %v162, 68
      %v892 = vpop.permute.xlu0 %891
      %893 = vrot.lane.b32.xlu0 %v166, 68
      %v894 = vpop.permute.xlu0 %893
      %895 = vrot.lane.b32.xlu0 %v185, 68
      %v896 = vpop.permute.xlu0 %895
      %vm897 = vcmp.lt.s32.totalorder %v196, 68
      %v898 = vsel %vm897, %v894, %v896
      %v899 = vsel %vm897, %v892, %v894
      %v900 = vsel %vm897, %v890, %v892
      %901 = vrot.lane.b32.xlu0 %v142, 113
      %v902 = vpop.permute.xlu0 %901
      %903 = vrot.lane.b32.xlu0 %v143, 113
      %v904 = vpop.permute.xlu0 %903
      %906 = vset.pattern.permute.xlu0 0
      %907 = vperm.xlu0 %906, %v902
      %v908 = vpop.permute.xlu0 %907
      %911 = vset.pattern.permute.xlu0 0
      %912 = vperm.xlu0 %911, %v904
      %v913 = vpop.permute.xlu0 %912
      %v915 = vlaneseq
      %v916 = vshrl.u32 %v915, 7
      %v917 = vsub.s32 0, %v916
      %v918 = vrot.slane %v900, %v917
      %v919 = vlaneseq
      %v920 = vshrl.u32 %v919, 7
      %v921 = vsub.s32 0, %v920
      %v922 = vrot.slane %v899, %v921
      %v923 = vlaneseq
      %v924 = vshrl.u32 %v923, 7
      %v925 = vsub.s32 0, %v924
      %v926 = vrot.slane %v898, %v925
      %v927 = vmul.f32 %v908, %v918
      %v928 = vmul.f32 %v908, %v922
      %v929 = vmul.f32 %v908, %v926
      %v930 = vmul.f32 %v913, %v918
      %v931 = vmul.f32 %v913, %v922
      %v932 = vmul.f32 %v913, %v926
      %v933 = vadd.f32 %v883, %v927
      %v934 = vadd.f32 %v884, %v928
      %v935 = vadd.f32 %v885, %v929
      %v936 = vadd.f32 %v886, %v930
      %v937 = vadd.f32 %v887, %v931
      %v938 = vadd.f32 %v888, %v932
      %939 = vrot.lane.b32.xlu0 %v158, 67
      %v940 = vpop.permute.xlu0 %939
      %941 = vrot.lane.b32.xlu0 %v162, 67
      %v942 = vpop.permute.xlu0 %941
      %943 = vrot.lane.b32.xlu0 %v166, 67
      %v944 = vpop.permute.xlu0 %943
      %945 = vrot.lane.b32.xlu0 %v185, 67
      %v946 = vpop.permute.xlu0 %945
      %vm947 = vcmp.lt.s32.totalorder %v196, 67
      %v948 = vsel %vm947, %v944, %v946
      %v949 = vsel %vm947, %v942, %v944
      %v950 = vsel %vm947, %v940, %v942
      %951 = vrot.lane.b32.xlu0 %v142, 112
      %v952 = vpop.permute.xlu0 %951
      %953 = vrot.lane.b32.xlu0 %v143, 112
      %v954 = vpop.permute.xlu0 %953
      %956 = vset.pattern.permute.xlu0 0
      %957 = vperm.xlu0 %956, %v952
      %v958 = vpop.permute.xlu0 %957
      %961 = vset.pattern.permute.xlu0 0
      %962 = vperm.xlu0 %961, %v954
      %v963 = vpop.permute.xlu0 %962
      %v965 = vlaneseq
      %v966 = vshrl.u32 %v965, 7
      %v967 = vsub.s32 0, %v966
      %v968 = vrot.slane %v950, %v967
      %v969 = vlaneseq
      %v970 = vshrl.u32 %v969, 7
      %v971 = vsub.s32 0, %v970
      %v972 = vrot.slane %v949, %v971
      %v973 = vlaneseq
      %v974 = vshrl.u32 %v973, 7
      %v975 = vsub.s32 0, %v974
      %v976 = vrot.slane %v948, %v975
      %v977 = vmul.f32 %v958, %v968
      %v978 = vmul.f32 %v958, %v972
      %v979 = vmul.f32 %v958, %v976
      %v980 = vmul.f32 %v963, %v968
      %v981 = vmul.f32 %v963, %v972
      %v982 = vmul.f32 %v963, %v976
      %v983 = vadd.f32 %v933, %v977
      %v984 = vadd.f32 %v934, %v978
      %v985 = vadd.f32 %v935, %v979
      %v986 = vadd.f32 %v936, %v980
      %v987 = vadd.f32 %v937, %v981
      %v988 = vadd.f32 %v938, %v982
      %989 = vrot.lane.b32.xlu0 %v158, 66
      %v990 = vpop.permute.xlu0 %989
      %991 = vrot.lane.b32.xlu0 %v162, 66
      %v992 = vpop.permute.xlu0 %991
      %993 = vrot.lane.b32.xlu0 %v166, 66
      %v994 = vpop.permute.xlu0 %993
      %995 = vrot.lane.b32.xlu0 %v185, 66
      %v996 = vpop.permute.xlu0 %995
      %vm997 = vcmp.lt.s32.totalorder %v196, 66
      %v998 = vsel %vm997, %v994, %v996
      %v999 = vsel %vm997, %v992, %v994
      %v1000 = vsel %vm997, %v990, %v992
      %1001 = vrot.lane.b32.xlu0 %v142, 111
      %v1002 = vpop.permute.xlu0 %1001
      %1003 = vrot.lane.b32.xlu0 %v143, 111
      %v1004 = vpop.permute.xlu0 %1003
      %1006 = vset.pattern.permute.xlu0 0
      %1007 = vperm.xlu0 %1006, %v1002
      %v1008 = vpop.permute.xlu0 %1007
      %1011 = vset.pattern.permute.xlu0 0
      %1012 = vperm.xlu0 %1011, %v1004
      %v1013 = vpop.permute.xlu0 %1012
      %v1015 = vlaneseq
      %v1016 = vshrl.u32 %v1015, 7
      %v1017 = vsub.s32 0, %v1016
      %v1018 = vrot.slane %v1000, %v1017
      %v1019 = vlaneseq
      %v1020 = vshrl.u32 %v1019, 7
      %v1021 = vsub.s32 0, %v1020
      %v1022 = vrot.slane %v999, %v1021
      %v1023 = vlaneseq
      %v1024 = vshrl.u32 %v1023, 7
      %v1025 = vsub.s32 0, %v1024
      %v1026 = vrot.slane %v998, %v1025
      %v1027 = vmul.f32 %v1008, %v1018
      %v1028 = vmul.f32 %v1008, %v1022
      %v1029 = vmul.f32 %v1008, %v1026
      %v1030 = vmul.f32 %v1013, %v1018
      %v1031 = vmul.f32 %v1013, %v1022
      %v1032 = vmul.f32 %v1013, %v1026
      %v1033 = vadd.f32 %v983, %v1027
      %v1034 = vadd.f32 %v984, %v1028
      %v1035 = vadd.f32 %v985, %v1029
      %v1036 = vadd.f32 %v986, %v1030
      %v1037 = vadd.f32 %v987, %v1031
      %v1038 = vadd.f32 %v988, %v1032
      %1039 = vrot.lane.b32.xlu0 %v158, 65
      %v1040 = vpop.permute.xlu0 %1039
      %1041 = vrot.lane.b32.xlu0 %v162, 65
      %v1042 = vpop.permute.xlu0 %1041
      %1043 = vrot.lane.b32.xlu0 %v166, 65
      %v1044 = vpop.permute.xlu0 %1043
      %1045 = vrot.lane.b32.xlu0 %v185, 65
      %v1046 = vpop.permute.xlu0 %1045
      %vm1047 = vcmp.lt.s32.totalorder %v196, 65
      %v1048 = vsel %vm1047, %v1044, %v1046
      %v1049 = vsel %vm1047, %v1042, %v1044
      %v1050 = vsel %vm1047, %v1040, %v1042
      %1051 = vrot.lane.b32.xlu0 %v142, 110
      %v1052 = vpop.permute.xlu0 %1051
      %1053 = vrot.lane.b32.xlu0 %v143, 110
      %v1054 = vpop.permute.xlu0 %1053
      %1056 = vset.pattern.permute.xlu0 0
      %1057 = vperm.xlu0 %1056, %v1052
      %v1058 = vpop.permute.xlu0 %1057
      %1061 = vset.pattern.permute.xlu0 0
      %1062 = vperm.xlu0 %1061, %v1054
      %v1063 = vpop.permute.xlu0 %1062
      %v1065 = vlaneseq
      %v1066 = vshrl.u32 %v1065, 7
      %v1067 = vsub.s32 0, %v1066
      %v1068 = vrot.slane %v1050, %v1067
      %v1069 = vlaneseq
      %v1070 = vshrl.u32 %v1069, 7
      %v1071 = vsub.s32 0, %v1070
      %v1072 = vrot.slane %v1049, %v1071
      %v1073 = vlaneseq
      %v1074 = vshrl.u32 %v1073, 7
      %v1075 = vsub.s32 0, %v1074
      %v1076 = vrot.slane %v1048, %v1075
      %v1077 = vmul.f32 %v1058, %v1068
      %v1078 = vmul.f32 %v1058, %v1072
      %v1079 = vmul.f32 %v1058, %v1076
      %v1080 = vmul.f32 %v1063, %v1068
      %v1081 = vmul.f32 %v1063, %v1072
      %v1082 = vmul.f32 %v1063, %v1076
      %v1083 = vadd.f32 %v1033, %v1077
      %v1084 = vadd.f32 %v1034, %v1078
      %v1085 = vadd.f32 %v1035, %v1079
      %v1086 = vadd.f32 %v1036, %v1080
      %v1087 = vadd.f32 %v1037, %v1081
      %v1088 = vadd.f32 %v1038, %v1082
      %1089 = vrot.lane.b32.xlu0 %v158, 64
      %v1090 = vpop.permute.xlu0 %1089
      %1091 = vrot.lane.b32.xlu0 %v162, 64
      %v1092 = vpop.permute.xlu0 %1091
      %1093 = vrot.lane.b32.xlu0 %v166, 64
      %v1094 = vpop.permute.xlu0 %1093
      %1095 = vrot.lane.b32.xlu0 %v185, 64
      %v1096 = vpop.permute.xlu0 %1095
      %vm1097 = vcmp.lt.s32.totalorder %v196, 64
      %v1098 = vsel %vm1097, %v1094, %v1096
      %v1099 = vsel %vm1097, %v1092, %v1094
      %v1100 = vsel %vm1097, %v1090, %v1092
      %1101 = vrot.lane.b32.xlu0 %v142, 109
      %v1102 = vpop.permute.xlu0 %1101
      %1103 = vrot.lane.b32.xlu0 %v143, 109
      %v1104 = vpop.permute.xlu0 %1103
      %1106 = vset.pattern.permute.xlu0 0
      %1107 = vperm.xlu0 %1106, %v1102
      %v1108 = vpop.permute.xlu0 %1107
      %1111 = vset.pattern.permute.xlu0 0
      %1112 = vperm.xlu0 %1111, %v1104
      %v1113 = vpop.permute.xlu0 %1112
      %v1115 = vlaneseq
      %v1116 = vshrl.u32 %v1115, 7
      %v1117 = vsub.s32 0, %v1116
      %v1118 = vrot.slane %v1100, %v1117
      %v1119 = vlaneseq
      %v1120 = vshrl.u32 %v1119, 7
      %v1121 = vsub.s32 0, %v1120
      %v1122 = vrot.slane %v1099, %v1121
      %v1123 = vlaneseq
      %v1124 = vshrl.u32 %v1123, 7
      %v1125 = vsub.s32 0, %v1124
      %v1126 = vrot.slane %v1098, %v1125
      %v1127 = vmul.f32 %v1108, %v1118
      %v1128 = vmul.f32 %v1108, %v1122
      %v1129 = vmul.f32 %v1108, %v1126
      %v1130 = vmul.f32 %v1113, %v1118
      %v1131 = vmul.f32 %v1113, %v1122
      %v1132 = vmul.f32 %v1113, %v1126
      %v1133 = vadd.f32 %v1083, %v1127
      %v1134 = vadd.f32 %v1084, %v1128
      %v1135 = vadd.f32 %v1085, %v1129
      %v1136 = vadd.f32 %v1086, %v1130
      %v1137 = vadd.f32 %v1087, %v1131
      %v1138 = vadd.f32 %v1088, %v1132
      %1139 = vrot.lane.b32.xlu0 %v158, 48
      %v1140 = vpop.permute.xlu0 %1139
      %1141 = vrot.lane.b32.xlu0 %v162, 48
      %v1142 = vpop.permute.xlu0 %1141
      %1143 = vrot.lane.b32.xlu0 %v166, 48
      %v1144 = vpop.permute.xlu0 %1143
      %1145 = vrot.lane.b32.xlu0 %v185, 48
      %v1146 = vpop.permute.xlu0 %1145
      %vm1147 = vcmp.lt.s32.totalorder %v196, 48
      %v1148 = vsel %vm1147, %v1144, %v1146
      %v1149 = vsel %vm1147, %v1142, %v1144
      %v1150 = vsel %vm1147, %v1140, %v1142
      %1151 = vrot.lane.b32.xlu0 %v142, 108
      %v1152 = vpop.permute.xlu0 %1151
      %1153 = vrot.lane.b32.xlu0 %v143, 108
      %v1154 = vpop.permute.xlu0 %1153
      %1156 = vset.pattern.permute.xlu0 0
      %1157 = vperm.xlu0 %1156, %v1152
      %v1158 = vpop.permute.xlu0 %1157
      %1161 = vset.pattern.permute.xlu0 0
      %1162 = vperm.xlu0 %1161, %v1154
      %v1163 = vpop.permute.xlu0 %1162
      %v1165 = vlaneseq
      %v1166 = vshrl.u32 %v1165, 7
      %v1167 = vsub.s32 0, %v1166
      %v1168 = vrot.slane %v1150, %v1167
      %v1169 = vlaneseq
      %v1170 = vshrl.u32 %v1169, 7
      %v1171 = vsub.s32 0, %v1170
      %v1172 = vrot.slane %v1149, %v1171
      %v1173 = vlaneseq
      %v1174 = vshrl.u32 %v1173, 7
      %v1175 = vsub.s32 0, %v1174
      %v1176 = vrot.slane %v1148, %v1175
      %v1177 = vmul.f32 %v1158, %v1168
      %v1178 = vmul.f32 %v1158, %v1172
      %v1179 = vmul.f32 %v1158, %v1176
      %v1180 = vmul.f32 %v1163, %v1168
      %v1181 = vmul.f32 %v1163, %v1172
      %v1182 = vmul.f32 %v1163, %v1176
      %v1183 = vadd.f32 %v1133, %v1177
      %v1184 = vadd.f32 %v1134, %v1178
      %v1185 = vadd.f32 %v1135, %v1179
      %v1186 = vadd.f32 %v1136, %v1180
      %v1187 = vadd.f32 %v1137, %v1181
      %v1188 = vadd.f32 %v1138, %v1182
      %1189 = vrot.lane.b32.xlu0 %v158, 47
      %v1190 = vpop.permute.xlu0 %1189
      %1191 = vrot.lane.b32.xlu0 %v162, 47
      %v1192 = vpop.permute.xlu0 %1191
      %1193 = vrot.lane.b32.xlu0 %v166, 47
      %v1194 = vpop.permute.xlu0 %1193
      %1195 = vrot.lane.b32.xlu0 %v185, 47
      %v1196 = vpop.permute.xlu0 %1195
      %vm1197 = vcmp.lt.s32.totalorder %v196, 47
      %v1198 = vsel %vm1197, %v1194, %v1196
      %v1199 = vsel %vm1197, %v1192, %v1194
      %v1200 = vsel %vm1197, %v1190, %v1192
      %1201 = vrot.lane.b32.xlu0 %v142, 107
      %v1202 = vpop.permute.xlu0 %1201
      %1203 = vrot.lane.b32.xlu0 %v143, 107
      %v1204 = vpop.permute.xlu0 %1203
      %1206 = vset.pattern.permute.xlu0 0
      %1207 = vperm.xlu0 %1206, %v1202
      %v1208 = vpop.permute.xlu0 %1207
      %1211 = vset.pattern.permute.xlu0 0
      %1212 = vperm.xlu0 %1211, %v1204
      %v1213 = vpop.permute.xlu0 %1212
      %v1215 = vlaneseq
      %v1216 = vshrl.u32 %v1215, 7
      %v1217 = vsub.s32 0, %v1216
      %v1218 = vrot.slane %v1200, %v1217
      %v1219 = vlaneseq
      %v1220 = vshrl.u32 %v1219, 7
      %v1221 = vsub.s32 0, %v1220
      %v1222 = vrot.slane %v1199, %v1221
      %v1223 = vlaneseq
      %v1224 = vshrl.u32 %v1223, 7
      %v1225 = vsub.s32 0, %v1224
      %v1226 = vrot.slane %v1198, %v1225
      %v1227 = vmul.f32 %v1208, %v1218
      %v1228 = vmul.f32 %v1208, %v1222
      %v1229 = vmul.f32 %v1208, %v1226
      %v1230 = vmul.f32 %v1213, %v1218
      %v1231 = vmul.f32 %v1213, %v1222
      %v1232 = vmul.f32 %v1213, %v1226
      %v1233 = vadd.f32 %v1183, %v1227
      %v1234 = vadd.f32 %v1184, %v1228
      %v1235 = vadd.f32 %v1185, %v1229
      %v1236 = vadd.f32 %v1186, %v1230
      %v1237 = vadd.f32 %v1187, %v1231
      %v1238 = vadd.f32 %v1188, %v1232
      %1239 = vrot.lane.b32.xlu0 %v158, 46
      %v1240 = vpop.permute.xlu0 %1239
      %1241 = vrot.lane.b32.xlu0 %v162, 46
      %v1242 = vpop.permute.xlu0 %1241
      %1243 = vrot.lane.b32.xlu0 %v166, 46
      %v1244 = vpop.permute.xlu0 %1243
      %1245 = vrot.lane.b32.xlu0 %v185, 46
      %v1246 = vpop.permute.xlu0 %1245
      %vm1247 = vcmp.lt.s32.totalorder %v196, 46
      %v1248 = vsel %vm1247, %v1244, %v1246
      %v1249 = vsel %vm1247, %v1242, %v1244
      %v1250 = vsel %vm1247, %v1240, %v1242
      %1251 = vrot.lane.b32.xlu0 %v142, 106
      %v1252 = vpop.permute.xlu0 %1251
      %1253 = vrot.lane.b32.xlu0 %v143, 106
      %v1254 = vpop.permute.xlu0 %1253
      %1256 = vset.pattern.permute.xlu0 0
      %1257 = vperm.xlu0 %1256, %v1252
      %v1258 = vpop.permute.xlu0 %1257
      %1261 = vset.pattern.permute.xlu0 0
      %1262 = vperm.xlu0 %1261, %v1254
      %v1263 = vpop.permute.xlu0 %1262
      %v1265 = vlaneseq
      %v1266 = vshrl.u32 %v1265, 7
      %v1267 = vsub.s32 0, %v1266
      %v1268 = vrot.slane %v1250, %v1267
      %v1269 = vlaneseq
      %v1270 = vshrl.u32 %v1269, 7
      %v1271 = vsub.s32 0, %v1270
      %v1272 = vrot.slane %v1249, %v1271
      %v1273 = vlaneseq
      %v1274 = vshrl.u32 %v1273, 7
      %v1275 = vsub.s32 0, %v1274
      %v1276 = vrot.slane %v1248, %v1275
      %v1277 = vmul.f32 %v1258, %v1268
      %v1278 = vmul.f32 %v1258, %v1272
      %v1279 = vmul.f32 %v1258, %v1276
      %v1280 = vmul.f32 %v1263, %v1268
      %v1281 = vmul.f32 %v1263, %v1272
      %v1282 = vmul.f32 %v1263, %v1276
      %v1283 = vadd.f32 %v1233, %v1277
      %v1284 = vadd.f32 %v1234, %v1278
      %v1285 = vadd.f32 %v1235, %v1279
      %v1286 = vadd.f32 %v1236, %v1280
      %v1287 = vadd.f32 %v1237, %v1281
      %v1288 = vadd.f32 %v1238, %v1282
      %1289 = vrot.lane.b32.xlu0 %v158, 45
      %v1290 = vpop.permute.xlu0 %1289
      %1291 = vrot.lane.b32.xlu0 %v162, 45
      %v1292 = vpop.permute.xlu0 %1291
      %1293 = vrot.lane.b32.xlu0 %v166, 45
      %v1294 = vpop.permute.xlu0 %1293
      %1295 = vrot.lane.b32.xlu0 %v185, 45
      %v1296 = vpop.permute.xlu0 %1295
      %vm1297 = vcmp.lt.s32.totalorder %v196, 45
      %v1298 = vsel %vm1297, %v1294, %v1296
      %v1299 = vsel %vm1297, %v1292, %v1294
      %v1300 = vsel %vm1297, %v1290, %v1292
      %1301 = vrot.lane.b32.xlu0 %v142, 105
      %v1302 = vpop.permute.xlu0 %1301
      %1303 = vrot.lane.b32.xlu0 %v143, 105
      %v1304 = vpop.permute.xlu0 %1303
      %1306 = vset.pattern.permute.xlu0 0
      %1307 = vperm.xlu0 %1306, %v1302
      %v1308 = vpop.permute.xlu0 %1307
      %1311 = vset.pattern.permute.xlu0 0
      %1312 = vperm.xlu0 %1311, %v1304
      %v1313 = vpop.permute.xlu0 %1312
      %v1315 = vlaneseq
      %v1316 = vshrl.u32 %v1315, 7
      %v1317 = vsub.s32 0, %v1316
      %v1318 = vrot.slane %v1300, %v1317
      %v1319 = vlaneseq
      %v1320 = vshrl.u32 %v1319, 7
      %v1321 = vsub.s32 0, %v1320
      %v1322 = vrot.slane %v1299, %v1321
      %v1323 = vlaneseq
      %v1324 = vshrl.u32 %v1323, 7
      %v1325 = vsub.s32 0, %v1324
      %v1326 = vrot.slane %v1298, %v1325
      %v1327 = vmul.f32 %v1308, %v1318
      %v1328 = vmul.f32 %v1308, %v1322
      %v1329 = vmul.f32 %v1308, %v1326
      %v1330 = vmul.f32 %v1313, %v1318
      %v1331 = vmul.f32 %v1313, %v1322
      %v1332 = vmul.f32 %v1313, %v1326
      %v1333 = vadd.f32 %v1283, %v1327
      %v1334 = vadd.f32 %v1284, %v1328
      %v1335 = vadd.f32 %v1285, %v1329
      %v1336 = vadd.f32 %v1286, %v1330
      %v1337 = vadd.f32 %v1287, %v1331
      %v1338 = vadd.f32 %v1288, %v1332
      %1339 = vrot.lane.b32.xlu0 %v158, 44
      %v1340 = vpop.permute.xlu0 %1339
      %1341 = vrot.lane.b32.xlu0 %v162, 44
      %v1342 = vpop.permute.xlu0 %1341
      %1343 = vrot.lane.b32.xlu0 %v166, 44
      %v1344 = vpop.permute.xlu0 %1343
      %1345 = vrot.lane.b32.xlu0 %v185, 44
      %v1346 = vpop.permute.xlu0 %1345
      %vm1347 = vcmp.lt.s32.totalorder %v196, 44
      %v1348 = vsel %vm1347, %v1344, %v1346
      %v1349 = vsel %vm1347, %v1342, %v1344
      %v1350 = vsel %vm1347, %v1340, %v1342
      %1351 = vrot.lane.b32.xlu0 %v142, 104
      %v1352 = vpop.permute.xlu0 %1351
      %1353 = vrot.lane.b32.xlu0 %v143, 104
      %v1354 = vpop.permute.xlu0 %1353
      %1356 = vset.pattern.permute.xlu0 0
      %1357 = vperm.xlu0 %1356, %v1352
      %v1358 = vpop.permute.xlu0 %1357
      %1361 = vset.pattern.permute.xlu0 0
      %1362 = vperm.xlu0 %1361, %v1354
      %v1363 = vpop.permute.xlu0 %1362
      %v1365 = vlaneseq
      %v1366 = vshrl.u32 %v1365, 7
      %v1367 = vsub.s32 0, %v1366
      %v1368 = vrot.slane %v1350, %v1367
      %v1369 = vlaneseq
      %v1370 = vshrl.u32 %v1369, 7
      %v1371 = vsub.s32 0, %v1370
      %v1372 = vrot.slane %v1349, %v1371
      %v1373 = vlaneseq
      %v1374 = vshrl.u32 %v1373, 7
      %v1375 = vsub.s32 0, %v1374
      %v1376 = vrot.slane %v1348, %v1375
      %v1377 = vmul.f32 %v1358, %v1368
      %v1378 = vmul.f32 %v1358, %v1372
      %v1379 = vmul.f32 %v1358, %v1376
      %v1380 = vmul.f32 %v1363, %v1368
      %v1381 = vmul.f32 %v1363, %v1372
      %v1382 = vmul.f32 %v1363, %v1376
      %v1383 = vadd.f32 %v1333, %v1377
      %v1384 = vadd.f32 %v1334, %v1378
      %v1385 = vadd.f32 %v1335, %v1379
      %v1386 = vadd.f32 %v1336, %v1380
      %v1387 = vadd.f32 %v1337, %v1381
      %v1388 = vadd.f32 %v1338, %v1382
      %1389 = vrot.lane.b32.xlu0 %v142, 103
      %v1390 = vpop.permute.xlu0 %1389
      %1391 = vrot.lane.b32.xlu0 %v143, 103
      %v1392 = vpop.permute.xlu0 %1391
      %1394 = vset.pattern.permute.xlu0 0
      %1395 = vperm.xlu0 %1394, %v1390
      %v1396 = vpop.permute.xlu0 %1395
      %1399 = vset.pattern.permute.xlu0 0
      %1400 = vperm.xlu0 %1399, %v1392
      %v1401 = vpop.permute.xlu0 %1400
      %v1403 = vadd.f32 %v1383, %v1396
      %v1404 = vadd.f32 %v1384, %v1396
      %v1405 = vadd.f32 %v1385, %v1396
      %v1406 = vadd.f32 %v1386, %v1401
      %v1407 = vadd.f32 %v1387, %v1401
      %v1408 = vadd.f32 %v1388, %v1401
      %v1409 = vmax.f32 %v1403, 0.0
      %v1410 = vmax.f32 %v1404, 0.0
      %v1411 = vmax.f32 %v1405, 0.0
      %v1412 = vmax.f32 %v1406, 0.0
      %v1413 = vmax.f32 %v1407, 0.0
      %v1414 = vmax.f32 %v1408, 0.0
      %1415 = vst [vmem:[%s140] sm:$0xff] %v1409
      %1416 = vst [vmem:[%s140 + $0x8] sm:$0xff] %v1410
      %1417 = vst [vmem:[%s140 + $0x10] sm:$0xff] %v1411
      %1418 = vst [vmem:[%s140 + $0x18] sm:$0xff] %v1412
      %1419 = vst [vmem:[%s140 + $0x20] sm:$0xff] %v1413
      %1420 = vst [vmem:[%s140 + $0x28] sm:$0xff] %v1414
      %p1421 = scmp.lt.s32.totalorder %s13, 1
      %s1422 = scalar_select %p1421, %s13, 1
      %s1423 = smul.addr %s1422, 6
      %s1424 = smul.addr %s1423, 8
      %s1425 = scalar_lea.vmem %s2, %s1424
      // Predicated region
      $region29: #{conv_forward.1} parent=27 // pred_check
        %p1426 = pneg %p78
      $region30: #{conv_forward.1} parent=27 // pred_check_branch
        %1428 = sbr.rel (%p1426) target = $region32
      $region31: #{conv_forward.1} parent=27 // pred_region
        _
      $region32: #{conv_forward.1} parent=27 // pred_fallthru
        _
    $region28: #{conv_forward.1} parent=5 // pred_fallthru
      _
    %p1429 = scmp.le.s32.totalorder 2, %s8
    // Predicated region
    $region33: #{conv_forward.1} parent=5 // pred_check
      %p1430 = pneg %p1429
    $region34: #{conv_forward.1} parent=5 // pred_check_branch
      %1432 = sbr.rel (%p1430) target = $region36
    $region35: #{conv_forward.1} parent=5 // pred_region
      %s1433 = ssub.s32 %s8, 2
      // Predicated region
      $region37: #{conv_forward.1} parent=35 // pred_check
        %p1434 = pneg %p84
      $region38: #{conv_forward.1} parent=35 // pred_check_branch
        %1436 = sbr.rel (%p1434) target = $region40
      $region39: #{conv_forward.1} parent=35 // pred_region
        %p1437 = scmp.lt.s32.totalorder %s14, 1
        %s1438 = scalar_select %p1437, %s14, 1
        %s1439 = smul.addr %s1438, 6
        %s1440 = smul.addr %s1439, 8
        %s1441 = scalar_lea.vmem %s2, %s1440
      $region40: #{conv_forward.1} parent=35 // pred_fallthru
        _
    $region36: #{conv_forward.1} parent=5 // pred_fallthru
      _
  $region6: #{conv_forward.1} parent=0 // loop_footer
    %s12 = sadd.s32 1, %s8
  $region7: #{conv_forward.1} parent=0 // loop_footer_branch
    %7 = sbr.rel target = $region3
  $region8: #{conv_forward.1} parent=0 // loop_exit
    _

</llo_original>
